<compile_context>
chip_gen: v7x
topology: tpu7x:2x2x1
jax: 0.10.0
libtpu: 0.0.40
codegen_flags: <defaults>
</compile_context>

<pallas_src>
import functools
import math

import jax
import jax.numpy as jnp
from jax.experimental import pallas as pl
from jax.experimental.pallas import tpu as pltpu

_MIB = 1024 * 1024


# --------------------------------------------------------------------------- #
# Hardware / tiling helpers (trace-time Python)                                #
# --------------------------------------------------------------------------- #
def _tpu_vmem_and_cores():
    """(physical VMEM bytes per TensorCore, TensorCores per chip).

    Conservative defaults (64 MiB, 1 core) if the query fails, so tiling never
    overshoots v7x's smaller VMEM."""
    vmem = 64 * _MIB
    cores = 1
    try:
        info = pltpu.get_tpu_info()
        for attr in ("vmem_capacity_bytes", "vmem_size_bytes", "vmem_bytes"):
            v = getattr(info, attr, None)
            if v:
                vmem = int(v)
                break
        got_cores = None
        for attr in ("num_tensorcores", "tensorcore_count", "num_cores", "core_count"):
            v = getattr(info, attr, None)
            if v:
                got_cores = int(v)
                break
        if got_cores is not None:
            cores = got_cores
        elif vmem <= 96 * _MIB:
            # Heuristic: v7x exposes 64 MiB VMEM per TC and has 2 TCs per chip.
            cores = 2
    except Exception:
        pass
    return vmem, cores


def _divisors_desc(n):
    return [d for d in range(n, 0, -1) if n % d == 0]


def _pick_batch_tile(B, per_batch_bytes, budget, cores):
    """Largest Bt dividing B whose buffered tiles fit `budget`.  On multi-core
    chips prefer a Bt that leaves a grid with (a multiple of) `cores` steps so
    the "parallel" batch axis can be sharded across TensorCores."""
    fits = [d for d in _divisors_desc(B) if d * per_batch_bytes <= budget]
    if not fits:
        return None
    if cores > 1 and B >= cores:
        pref = [d for d in fits if (B // d) >= cores and (B // d) % cores == 0]
        if pref:
            return pref[0]
        pref = [d for d in fits if (B // d) >= cores]
        if pref:
            return pref[0]
    return fits[0]


def _pick_hw_tile(HW, per_row_bytes, budget, cores):
    """Largest spatial tile dividing HW that satisfies the (8,128) rule
    (multiple of 8 or full extent) and fits `budget`."""
    cands = [d for d in _divisors_desc(HW) if d % 8 == 0 or d == HW]
    fits = [d for d in cands if d * per_row_bytes <= budget]
    if not fits:
        fits = [cands[-1]]          # smallest legal tile; vmem_limit sized to it
    if cores > 1:
        pref = [d for d in fits if (HW // d) >= cores and (HW // d) % cores == 0]
        if pref:
            return pref[0]
    return fits[0]


def _fold_factor(HW, C):
    """k with k*C a multiple of 128 and k | HW (k = 1 if impossible): folding k
    spatial rows into the channel axis keeps the streamed stores lane-dense."""
    if C % 128 == 0:
        return 1
    k = 128 // math.gcd(C, 128)
    return k if (k > 1 and HW % k == 0) else 1


# --------------------------------------------------------------------------- #
# In-kernel helpers                                                            #
# --------------------------------------------------------------------------- #
def _f32_spatial_sum(x_ref, max_chunk_elems=512 * 1024):
    """Sum a (bt, hw, c) ref over axis 1 with f32 accumulation, in chunks so the
    f32 temporaries stay small instead of a full-tile f32 copy of x."""
    bt, hw, c = x_ref.shape
    if jnp.dtype(x_ref.dtype) == jnp.dtype(jnp.float32):
        return jnp.sum(x_ref[...], axis=1)
    rows = max(1, min(hw, max_chunk_elems // max(bt * c, 1)))
    acc = jnp.zeros((bt, c), jnp.float32)
    i = 0
    while i < hw:                    # static Python loop (hw is a trace-time int)
        n = min(rows, hw - i)
        acc = acc + jnp.sum(x_ref[:, i:i + n, :].astype(jnp.float32), axis=1)
        i += n
    return acc


def _collapse_folds(v, k, c):
    """(bt, k*c) -> (bt, c): sum the k lane-folds (static unroll, tiny)."""
    if k == 1:
        return v
    out = v[:, 0:c]
    for j in range(1, k):
        out = out + v[:, j * c:(j + 1) * c]
    return out


def _tile_folds(v, k):
    """(bt, c) -> (bt, k*c): each lane-fold sees its channel's scale."""
    if k == 1:
        return v
    return jnp.concatenate([v] * k, axis=1)


def _mlp_scale(mean, w1t_ref, b1_ref, w2t_ref, b2_ref):
    """ReLU/Sigmoid excitation MLP on the MXU with f32 accumulation."""
    h = jnp.dot(mean.astype(w1t_ref.dtype), w1t_ref[...],
                preferred_element_type=jnp.float32) + b1_ref[...]
    h = jnp.maximum(h, 0.0)
    s = jnp.dot(h.astype(w2t_ref.dtype), w2t_ref[...],
                preferred_element_type=jnp.float32) + b2_ref[...]
    return jax.nn.sigmoid(s)


# --------------------------------------------------------------------------- #
# Kernels                                                                      #
# --------------------------------------------------------------------------- #
def _se_fused_kernel(x_ref, w1t_ref, b1_ref, w2t_ref, b2_ref, o_ref, *, k, c, inv_hw):
    """One (Bt, HW/k, k*C) tile: squeeze + excitation MLP + rescale."""
    mean = _collapse_folds(_f32_spatial_sum(x_ref), k, c) * inv_hw       # (Bt, C) f32
    s = _mlp_scale(mean, w1t_ref, b1_ref, w2t_ref, b2_ref)               # (Bt, C) f32
    s = _tile_folds(s, k).astype(o_ref.dtype)                            # (Bt, k*C)
    o_ref[...] = x_ref[...] * s[:, None, :]                              # I/O-dtype multiply


def _se_pool_scale_kernel(x_ref, w1t_ref, b1_ref, w2t_ref, b2_ref, s_ref, *, k, c, inv_hw):
    """Two-pass A: accumulate channel sums over the HW-tiled ("arbitrary") axis;
    run the tiny MLP on the last step, leaving the per-batch scale in s_ref."""
    h_id = pl.program_id(1)

    @pl.when(h_id == 0)
    def _():
        s_ref[...] = jnp.zeros_like(s_ref)

    s_ref[...] += _f32_spatial_sum(x_ref)[:, None, :]

    @pl.when(h_id == pl.num_programs(1) - 1)
    def _():
        mean = _collapse_folds(s_ref[...][:, 0, :], k, c) * inv_hw
        s = _mlp_scale(mean, w1t_ref, b1_ref, w2t_ref, b2_ref)
        s_ref[...] = _tile_folds(s, k)[:, None, :]


def _se_excite_kernel(s_ref, x_ref, o_ref):
    """Two-pass B: out = scale * x, tiled over (B, HW)."""
    o_ref[...] = x_ref[...] * s_ref[...].astype(o_ref.dtype)


# --------------------------------------------------------------------------- #
# pallas_call builders                                                         #
# --------------------------------------------------------------------------- #
def _vmem_limit(needed, tile_bytes, vmem_cap):
    # Actual allocation + one tile of slack for in-kernel temporaries, clamped
    # just below physical per-core VMEM.
    return int(min(vmem_cap - 2 * _MIB, max(32 * _MIB, needed + tile_bytes + 8 * _MIB)))


def _run_fused(x3, w1t, b1r, w2t, b2r, *, bt, k, c, inv_hw, itemsize,
               weight_bytes, vmem_cap, single_buffer_weights):
    B, HW2, C2 = x3.shape
    S = w1t.shape[1]
    wkw = dict(pipeline_mode=pl.Buffered(1)) if single_buffer_weights else {}

    tile_bytes = bt * HW2 * C2 * itemsize
    needed = 4 * tile_bytes + (1 if single_buffer_weights else 2) * weight_bytes
    cost = pl.CostEstimate(
        flops=int(B * (2 * HW2 * C2 + 4 * c * S)),
        transcendentals=int(B * c),
        bytes_accessed=int(2 * B * HW2 * C2 * itemsize + weight_bytes),
    )
    kernel = functools.partial(_se_fused_kernel, k=k, c=c, inv_hw=inv_hw)
    return pl.pallas_call(
        kernel,
        out_shape=jax.ShapeDtypeStruct((B, HW2, C2), x3.dtype),
        grid_spec=pltpu.PrefetchScalarGridSpec(
            num_scalar_prefetch=0,
            grid=(B // bt,),
            in_specs=[
                pl.BlockSpec((bt, HW2, C2), lambda b: (b, 0, 0)),        # streamed x
                pl.BlockSpec(w1t.shape, lambda b: (0, 0), **wkw),        # fc1 W^T (resident)
                pl.BlockSpec(b1r.shape, lambda b: (0, 0), **wkw),        # fc1 bias
                pl.BlockSpec(w2t.shape, lambda b: (0, 0), **wkw),        # fc2 W^T (resident)
                pl.BlockSpec(b2r.shape, lambda b: (0, 0), **wkw),        # fc2 bias
            ],
            out_specs=pl.BlockSpec((bt, HW2, C2), lambda b: (b, 0, 0)),
        ),
        compiler_params=pltpu.CompilerParams(
            dimension_semantics=("parallel",),
            vmem_limit_bytes=_vmem_limit(needed, tile_bytes, vmem_cap),
        ),
        cost_estimate=cost,
    )(x3, w1t, b1r, w2t, b2r)


def _run_two_pass(x3, w1t, b1r, w2t, b2r, *, hw_t, k, c, inv_hw, itemsize,
                  weight_bytes, vmem_cap, single_buffer_weights):
    B, HW2, C2 = x3.shape
    S = w1t.shape[1]
    n_hw = HW2 // hw_t
    wkw = dict(pipeline_mode=pl.Buffered(1)) if single_buffer_weights else {}
    tile_bytes = hw_t * C2 * itemsize

    # ---- Pass A: pooled channel sums + MLP -> per-batch scale (B, 1, k*C) f32.
    needed_a = 2 * tile_bytes + (1 if single_buffer_weights else 2) * weight_bytes + 2 * C2 * 4
    cost_a = pl.CostEstimate(
        flops=int(B * (HW2 * C2 + 4 * c * S)),
        transcendentals=int(B * c),
        bytes_accessed=int(B * HW2 * C2 * itemsize + weight_bytes + B * C2 * 4),
    )
    pool_kernel = functools.partial(_se_pool_scale_kernel, k=k, c=c, inv_hw=inv_hw)
    scale = pl.pallas_call(
        pool_kernel,
        out_shape=jax.ShapeDtypeStruct((B, 1, C2), jnp.float32),
        grid_spec=pltpu.PrefetchScalarGridSpec(
            num_scalar_prefetch=0,
            grid=(B, n_hw),
            in_specs=[
                pl.BlockSpec((1, hw_t, C2), lambda b, h: (b, h, 0)),
                pl.BlockSpec(w1t.shape, lambda b, h: (0, 0), **wkw),
                pl.BlockSpec(b1r.shape, lambda b, h: (0, 0), **wkw),
                pl.BlockSpec(w2t.shape, lambda b, h: (0, 0), **wkw),
                pl.BlockSpec(b2r.shape, lambda b, h: (0, 0), **wkw),
            ],
            out_specs=pl.BlockSpec((1, 1, C2), lambda b, h: (b, 0, 0)),
        ),
        compiler_params=pltpu.CompilerParams(
            dimension_semantics=("parallel", "arbitrary"),
            vmem_limit_bytes=_vmem_limit(needed_a, tile_bytes, vmem_cap),
        ),
        cost_estimate=cost_a,
    )(x3, w1t, b1r, w2t, b2r)

    # ---- Pass B: out = scale * x (pure streaming multiply).
    needed_b = 4 * tile_bytes + 2 * C2 * 4
    cost_b = pl.CostEstimate(
        flops=int(B * HW2 * C2),
        transcendentals=0,
        bytes_accessed=int(2 * B * HW2 * C2 * itemsize + B * C2 * 4),
    )
    return pl.pallas_call(
        _se_excite_kernel,
        out_shape=jax.ShapeDtypeStruct((B, HW2, C2), x3.dtype),
        grid_spec=pltpu.PrefetchScalarGridSpec(
            num_scalar_prefetch=0,
            grid=(B, n_hw),
            in_specs=[
                pl.BlockSpec((1, 1, C2), lambda b, h: (b, 0, 0)),
                pl.BlockSpec((1, hw_t, C2), lambda b, h: (b, h, 0)),
            ],
            out_specs=pl.BlockSpec((1, hw_t, C2), lambda b, h: (b, h, 0)),
        ),
        compiler_params=pltpu.CompilerParams(
            dimension_semantics=("parallel", "parallel"),
            vmem_limit_bytes=_vmem_limit(needed_b, tile_bytes, vmem_cap),
        ),
        cost_estimate=cost_b,
    )(scale, x3)


# --------------------------------------------------------------------------- #
# Public wrappers                                                              #
# --------------------------------------------------------------------------- #
def squeeze_excitation_nhwc(x_nhwc, w1, b1, w2, b2, *,
                            force_two_pass=False, tile_budget_override=None):
    """SE block on channels-last input (the fast path).

    x_nhwc: (B, H, W, C).  w1: (S, C), b1: (S,), w2: (C, S), b2: (C,)
    (the torch Conv2d 1x1 weights with the trailing kernel dims squeezed out).
    """
    B, H, W, C = x_nhwc.shape
    S = w1.shape[0]
    HW = H * W
    itemsize = jnp.dtype(x_nhwc.dtype).itemsize

    # Lane-density folding: stream x as (B, HW/k, k*C) with k*C % 128 == 0.
    k = _fold_factor(HW, C)
    HW2, C2 = HW // k, k * C
    x3 = x_nhwc.reshape(B, HW2, C2)                  # free row-major reshape

    # Resident MLP weights: transpose once, cast to the activation dtype.
    wdt = x_nhwc.dtype
    w1t = jnp.asarray(w1).astype(wdt).T              # (C, S)
    w2t = jnp.asarray(w2).astype(wdt).T              # (S, C)
    b1r = jnp.asarray(b1, jnp.float32).reshape(1, S)
    b2r = jnp.asarray(b2, jnp.float32).reshape(1, C)
    weight_bytes = int((w1t.size + w2t.size) * jnp.dtype(wdt).itemsize + (S + C) * 4)

    # Generation-aware VMEM budget: ~75% of physical per-core VMEM for the
    # streamed tiles (2 in + 2 out buffers), minus worst-case buffered weights.
    vmem_cap, cores = _tpu_vmem_and_cores()
    if tile_budget_override is not None:
        tile_budget = int(tile_budget_override)
    else:
        tile_budget = max(int(vmem_cap * 3 // 4) - 2 * weight_bytes, 8 * _MIB)

    inv_hw = 1.0 / float(HW)
    common = dict(k=k, c=C, inv_hw=inv_hw, itemsize=itemsize,
                  weight_bytes=weight_bytes, vmem_cap=vmem_cap)

    bt = None
    if not force_two_pass:
        bt = _pick_batch_tile(B, 4 * HW2 * C2 * itemsize, tile_budget, cores)

    def run(single_buffer_weights):
        if bt is not None:
            return _run_fused(x3, w1t, b1r, w2t, b2r, bt=bt,
                              single_buffer_weights=single_buffer_weights, **common)
        hw_t = _pick_hw_tile(HW2, 4 * C2 * itemsize, tile_budget, cores)
        return _run_two_pass(x3, w1t, b1r, w2t, b2r, hw_t=hw_t,
                             single_buffer_weights=single_buffer_weights, **common)

    try:
        out3 = run(True)        # single-buffered resident weights (pl.Buffered(1))
    except Exception:
        out3 = run(False)       # runtime rejected Buffered(1): default buffering

    return out3.reshape(B, H, W, C)


def squeeze_excitation(x_nchw, w1, b1, w2, b2, **kwargs):
    """PyTorch-parity entry point: NCHW in, NCHW out.

    The two layout transposes here are full extra HBM passes; NHWC callers
    should use squeeze_excitation_nhwc directly.
    """
    # TODO(synk): NCHW-native kernel variant (channels on sublanes) to drop the
    # wrapper transposes for NCHW callers.
    out_nhwc = squeeze_excitation_nhwc(
        jnp.transpose(x_nchw, (0, 2, 3, 1)), w1, b1, w2, b2, **kwargs)
    return jnp.transpose(out_nhwc, (0, 3, 1, 2))


def _reference(x, w1, b1, w2, b2):
    """Pure-JAX NCHW reference (AdaptiveAvgPool2d(1) -> 1x1 conv -> ReLU ->
    1x1 conv -> Sigmoid -> multiply)."""
    mean = jnp.mean(x, axis=(2, 3))                              # (B, C)
    h = jnp.maximum(mean @ w1.T + b1, 0.0)                       # (B, S)
    s = jax.nn.sigmoid(h @ w2.T + b2)                            # (B, C)
    return x * s[:, :, None, None]


if __name__ == "__main__":
    keys = jax.random.split(jax.random.PRNGKey(0), 10)

    # SqueezeExcitation(input_channels=4, squeeze_channels=2) on (2, 4, 16, 16).
    B, C, S, H, W = 2, 4, 2, 16, 16
    x = jax.random.normal(keys[0], (B, C, H, W), dtype=jnp.float32)
    # Conv2d(C, S, 1) weight is (S, C, 1, 1) in torch -> here (S, C); bias (S,).
    w1 = jax.random.normal(keys[1], (S, C), dtype=jnp.float32) * 0.1
    b1 = jax.random.normal(keys[2], (S,), dtype=jnp.float32) * 0.1
    w2 = jax.random.normal(keys[3], (C, S), dtype=jnp.float32) * 0.1
    b2 = jax.random.normal(keys[4], (C,), dtype=jnp.float32) * 0.1

    # Fused single-kernel path, f32 I/O (exact vs reference).
    out = jax.block_until_ready(squeeze_excitation(x, w1, b1, w2, b2))
    ref = _reference(x, w1, b1, w2, b2)
    assert out.shape == (B, C, H, W)
    assert jnp.allclose(out, ref, atol=1e-5, rtol=1e-5), "f32 fused path mismatch"

    # bf16 I/O (bf16 streaming + bf16 resident weights, f32 accumulation).
    x_bf = x.astype(jnp.bfloat16)
    out_bf = jax.block_until_ready(squeeze_excitation(x_bf, w1, b1, w2, b2))
    ref_bf = _reference(x_bf.astype(jnp.float32), w1, b1, w2, b2)
    assert out_bf.dtype == jnp.bfloat16
    assert jnp.allclose(out_bf.astype(jnp.float32), ref_bf, atol=5e-2, rtol=5e-2), \
        "bf16 fused path mismatch"

    # Two-pass fallback (large-spatial feature maps), forced here at a small
    # shape with a tiny tile budget so the HW-tiled reduction takes >1 grid step.
    C3, S3 = 8, 4
    x2 = jax.random.normal(keys[5], (B, C3, H, W), dtype=jnp.float32)
    w12 = jax.random.normal(keys[6], (S3, C3), dtype=jnp.float32) * 0.1
    b12 = jax.random.normal(keys[7], (S3,), dtype=jnp.float32) * 0.1
    w22 = jax.random.normal(keys[8], (C3, S3), dtype=jnp.float32) * 0.1
    b22 = jax.random.normal(keys[9], (C3,), dtype=jnp.float32) * 0.1
    out2 = jax.block_until_ready(squeeze_excitation(
        x2, w12, b12, w22, b22, force_two_pass=True, tile_budget_override=16 * 1024))
    ref2 = _reference(x2, w12, b12, w22, b22)
    assert jnp.allclose(out2, ref2, atol=1e-5, rtol=1e-5), "two-pass path mismatch"

    print("KERNEL_OK")
</pallas_src>

<mosaic_0001>
module attributes {stable_mosaic.version = 11 : i64} {
  func.func @_se_fused_kernel(%arg0: i32, %arg1: memref<2x8x128xf32, #tpu.memory_space<vmem>>, %arg2: memref<4x2xf32, #tpu.memory_space<vmem>>, %arg3: memref<1x2xf32, #tpu.memory_space<vmem>>, %arg4: memref<2x4xf32, #tpu.memory_space<vmem>>, %arg5: memref<1x4xf32, #tpu.memory_space<vmem>>, %arg6: memref<2x8x128xf32, #tpu.memory_space<vmem>>) attributes {dimension_semantics = [#tpu.dimension_semantics<parallel>], iteration_bounds = array<i64: 1>, scalar_prefetch = 0 : i64, scratch_operands = 0 : i64, tpu.core_type = #tpu.core_type<tc>, window_params = [{transform_indices = @transform_0, window_bounds = array<i64: 2, 8, 128>}, {pipeline_mode = #tpu.pipeline_mode<synchronous>, transform_indices = @transform_1, window_bounds = array<i64: 4, 2>}, {pipeline_mode = #tpu.pipeline_mode<synchronous>, transform_indices = @transform_2, window_bounds = array<i64: 1, 2>}, {pipeline_mode = #tpu.pipeline_mode<synchronous>, transform_indices = @transform_3, window_bounds = array<i64: 2, 4>}, {pipeline_mode = #tpu.pipeline_mode<synchronous>, transform_indices = @transform_4, window_bounds = array<i64: 1, 4>}, {transform_indices = @transform_5, window_bounds = array<i64: 2, 8, 128>}]} {
    %c0 = arith.constant 0 : index
    %c0_0 = arith.constant 0 : index
    %c0_1 = arith.constant 0 : index
    %0 = vector.load %arg1[%c0, %c0_0, %c0_1] : memref<2x8x128xf32, #tpu.memory_space<vmem>>, vector<2x8x128xf32>
    %cst = arith.constant dense<0.000000e+00> : vector<2x128xf32>
    %1 = vector.multi_reduction <add>, %0, %cst [1] : vector<2x8x128xf32> to vector<2x128xf32>
    %2 = vector.extract_strided_slice %1 {offsets = [0, 0], sizes = [2, 4], strides = [1, 1]} : vector<2x128xf32> to vector<2x4xf32>
    %3 = vector.extract_strided_slice %1 {offsets = [0, 4], sizes = [2, 4], strides = [1, 1]} : vector<2x128xf32> to vector<2x4xf32>
    %4 = arith.addf %2, %3 : vector<2x4xf32>
    %5 = vector.extract_strided_slice %1 {offsets = [0, 8], sizes = [2, 4], strides = [1, 1]} : vector<2x128xf32> to vector<2x4xf32>
    %6 = arith.addf %4, %5 : vector<2x4xf32>
    %7 = vector.extract_strided_slice %1 {offsets = [0, 12], sizes = [2, 4], strides = [1, 1]} : vector<2x128xf32> to vector<2x4xf32>
    %8 = arith.addf %6, %7 : vector<2x4xf32>
    %9 = vector.extract_strided_slice %1 {offsets = [0, 16], sizes = [2, 4], strides = [1, 1]} : vector<2x128xf32> to vector<2x4xf32>
    %10 = arith.addf %8, %9 : vector<2x4xf32>
    %11 = vector.extract_strided_slice %1 {offsets = [0, 20], sizes = [2, 4], strides = [1, 1]} : vector<2x128xf32> to vector<2x4xf32>
    %12 = arith.addf %10, %11 : vector<2x4xf32>
    %13 = vector.extract_strided_slice %1 {offsets = [0, 24], sizes = [2, 4], strides = [1, 1]} : vector<2x128xf32> to vector<2x4xf32>
    %14 = arith.addf %12, %13 : vector<2x4xf32>
    %15 = vector.extract_strided_slice %1 {offsets = [0, 28], sizes = [2, 4], strides = [1, 1]} : vector<2x128xf32> to vector<2x4xf32>
    %16 = arith.addf %14, %15 : vector<2x4xf32>
    %17 = vector.extract_strided_slice %1 {offsets = [0, 32], sizes = [2, 4], strides = [1, 1]} : vector<2x128xf32> to vector<2x4xf32>
    %18 = arith.addf %16, %17 : vector<2x4xf32>
    %19 = vector.extract_strided_slice %1 {offsets = [0, 36], sizes = [2, 4], strides = [1, 1]} : vector<2x128xf32> to vector<2x4xf32>
    %20 = arith.addf %18, %19 : vector<2x4xf32>
    %21 = vector.extract_strided_slice %1 {offsets = [0, 40], sizes = [2, 4], strides = [1, 1]} : vector<2x128xf32> to vector<2x4xf32>
    %22 = arith.addf %20, %21 : vector<2x4xf32>
    %23 = vector.extract_strided_slice %1 {offsets = [0, 44], sizes = [2, 4], strides = [1, 1]} : vector<2x128xf32> to vector<2x4xf32>
    %24 = arith.addf %22, %23 : vector<2x4xf32>
    %25 = vector.extract_strided_slice %1 {offsets = [0, 48], sizes = [2, 4], strides = [1, 1]} : vector<2x128xf32> to vector<2x4xf32>
    %26 = arith.addf %24, %25 : vector<2x4xf32>
    %27 = vector.extract_strided_slice %1 {offsets = [0, 52], sizes = [2, 4], strides = [1, 1]} : vector<2x128xf32> to vector<2x4xf32>
    %28 = arith.addf %26, %27 : vector<2x4xf32>
    %29 = vector.extract_strided_slice %1 {offsets = [0, 56], sizes = [2, 4], strides = [1, 1]} : vector<2x128xf32> to vector<2x4xf32>
    %30 = arith.addf %28, %29 : vector<2x4xf32>
    %31 = vector.extract_strided_slice %1 {offsets = [0, 60], sizes = [2, 4], strides = [1, 1]} : vector<2x128xf32> to vector<2x4xf32>
    %32 = arith.addf %30, %31 : vector<2x4xf32>
    %33 = vector.extract_strided_slice %1 {offsets = [0, 64], sizes = [2, 4], strides = [1, 1]} : vector<2x128xf32> to vector<2x4xf32>
    %34 = arith.addf %32, %33 : vector<2x4xf32>
    %35 = vector.extract_strided_slice %1 {offsets = [0, 68], sizes = [2, 4], strides = [1, 1]} : vector<2x128xf32> to vector<2x4xf32>
    %36 = arith.addf %34, %35 : vector<2x4xf32>
    %37 = vector.extract_strided_slice %1 {offsets = [0, 72], sizes = [2, 4], strides = [1, 1]} : vector<2x128xf32> to vector<2x4xf32>
    %38 = arith.addf %36, %37 : vector<2x4xf32>
    %39 = vector.extract_strided_slice %1 {offsets = [0, 76], sizes = [2, 4], strides = [1, 1]} : vector<2x128xf32> to vector<2x4xf32>
    %40 = arith.addf %38, %39 : vector<2x4xf32>
    %41 = vector.extract_strided_slice %1 {offsets = [0, 80], sizes = [2, 4], strides = [1, 1]} : vector<2x128xf32> to vector<2x4xf32>
    %42 = arith.addf %40, %41 : vector<2x4xf32>
    %43 = vector.extract_strided_slice %1 {offsets = [0, 84], sizes = [2, 4], strides = [1, 1]} : vector<2x128xf32> to vector<2x4xf32>
    %44 = arith.addf %42, %43 : vector<2x4xf32>
    %45 = vector.extract_strided_slice %1 {offsets = [0, 88], sizes = [2, 4], strides = [1, 1]} : vector<2x128xf32> to vector<2x4xf32>
    %46 = arith.addf %44, %45 : vector<2x4xf32>
    %47 = vector.extract_strided_slice %1 {offsets = [0, 92], sizes = [2, 4], strides = [1, 1]} : vector<2x128xf32> to vector<2x4xf32>
    %48 = arith.addf %46, %47 : vector<2x4xf32>
    %49 = vector.extract_strided_slice %1 {offsets = [0, 96], sizes = [2, 4], strides = [1, 1]} : vector<2x128xf32> to vector<2x4xf32>
    %50 = arith.addf %48, %49 : vector<2x4xf32>
    %51 = vector.extract_strided_slice %1 {offsets = [0, 100], sizes = [2, 4], strides = [1, 1]} : vector<2x128xf32> to vector<2x4xf32>
    %52 = arith.addf %50, %51 : vector<2x4xf32>
    %53 = vector.extract_strided_slice %1 {offsets = [0, 104], sizes = [2, 4], strides = [1, 1]} : vector<2x128xf32> to vector<2x4xf32>
    %54 = arith.addf %52, %53 : vector<2x4xf32>
    %55 = vector.extract_strided_slice %1 {offsets = [0, 108], sizes = [2, 4], strides = [1, 1]} : vector<2x128xf32> to vector<2x4xf32>
    %56 = arith.addf %54, %55 : vector<2x4xf32>
    %57 = vector.extract_strided_slice %1 {offsets = [0, 112], sizes = [2, 4], strides = [1, 1]} : vector<2x128xf32> to vector<2x4xf32>
    %58 = arith.addf %56, %57 : vector<2x4xf32>
    %59 = vector.extract_strided_slice %1 {offsets = [0, 116], sizes = [2, 4], strides = [1, 1]} : vector<2x128xf32> to vector<2x4xf32>
    %60 = arith.addf %58, %59 : vector<2x4xf32>
    %61 = vector.extract_strided_slice %1 {offsets = [0, 120], sizes = [2, 4], strides = [1, 1]} : vector<2x128xf32> to vector<2x4xf32>
    %62 = arith.addf %60, %61 : vector<2x4xf32>
    %63 = vector.extract_strided_slice %1 {offsets = [0, 124], sizes = [2, 4], strides = [1, 1]} : vector<2x128xf32> to vector<2x4xf32>
    %64 = arith.addf %62, %63 : vector<2x4xf32>
    %cst_2 = arith.constant 3.906250e-03 : f32
    %65 = vector.broadcast %cst_2 : f32 to vector<2x4xf32>
    %66 = arith.mulf %64, %65 : vector<2x4xf32>
    %c0_3 = arith.constant 0 : index
    %c0_4 = arith.constant 0 : index
    %67 = vector.load %arg2[%c0_3, %c0_4] : memref<4x2xf32, #tpu.memory_space<vmem>>, vector<4x2xf32>
    %cst_5 = arith.constant dense<0.000000e+00> : vector<2x2xf32>
    %68 = tpu.matmul %66, %67, %cst_5 {dimension_numbers = #tpu.dot_dimension_numbers<[1], [0], [0], [1], [0, 0, 1, 1], [], []>} : vector<2x4xf32>, vector<4x2xf32>, vector<2x2xf32> -> vector<2x2xf32>
    %c0_6 = arith.constant 0 : index
    %c0_7 = arith.constant 0 : index
    %69 = vector.load %arg3[%c0_6, %c0_7] : memref<1x2xf32, #tpu.memory_space<vmem>>, vector<1x2xf32>
    %70 = vector.broadcast %69 : vector<1x2xf32> to vector<2x2xf32>
    %71 = arith.addf %68, %70 : vector<2x2xf32>
    %cst_8 = arith.constant 0.000000e+00 : f32
    %72 = vector.broadcast %cst_8 : f32 to vector<2x2xf32>
    %73 = arith.maximumf %71, %72 : vector<2x2xf32>
    %c0_9 = arith.constant 0 : index
    %c0_10 = arith.constant 0 : index
    %74 = vector.load %arg4[%c0_9, %c0_10] : memref<2x4xf32, #tpu.memory_space<vmem>>, vector<2x4xf32>
    %cst_11 = arith.constant dense<0.000000e+00> : vector<2x4xf32>
    %75 = tpu.matmul %73, %74, %cst_11 {dimension_numbers = #tpu.dot_dimension_numbers<[1], [0], [0], [1], [0, 0, 1, 1], [], []>} : vector<2x2xf32>, vector<2x4xf32>, vector<2x4xf32> -> vector<2x4xf32>
    %c0_12 = arith.constant 0 : index
    %c0_13 = arith.constant 0 : index
    %76 = vector.load %arg5[%c0_12, %c0_13] : memref<1x4xf32, #tpu.memory_space<vmem>>, vector<1x4xf32>
    %77 = vector.broadcast %76 : vector<1x4xf32> to vector<2x4xf32>
    %78 = arith.addf %75, %77 : vector<2x4xf32>
    %79 = arith.negf %78 : vector<2x4xf32>
    %80 = math.exp %79 : vector<2x4xf32>
    %cst_14 = arith.constant 1.000000e+00 : f32
    %81 = vector.broadcast %cst_14 : f32 to vector<2x4xf32>
    %82 = arith.addf %81, %80 : vector<2x4xf32>
    %83 = arith.divf %81, %82 : vector<2x4xf32>
    %84 = tpu.concatenate %83, %83, %83, %83, %83, %83, %83, %83, %83, %83, %83, %83, %83, %83, %83, %83 in 1 : vector<2x4xf32>, vector<2x4xf32>, vector<2x4xf32>, vector<2x4xf32>, vector<2x4xf32>, vector<2x4xf32>, vector<2x4xf32>, vector<2x4xf32>, vector<2x4xf32>, vector<2x4xf32>, vector<2x4xf32>, vector<2x4xf32>, vector<2x4xf32>, vector<2x4xf32>, vector<2x4xf32>, vector<2x4xf32> -> vector<2x64xf32>
    %85 = tpu.concatenate %83, %83, %83, %83, %83, %83, %83, %83, %83, %83, %83, %83, %83, %83, %83, %83 in 1 : vector<2x4xf32>, vector<2x4xf32>, vector<2x4xf32>, vector<2x4xf32>, vector<2x4xf32>, vector<2x4xf32>, vector<2x4xf32>, vector<2x4xf32>, vector<2x4xf32>, vector<2x4xf32>, vector<2x4xf32>, vector<2x4xf32>, vector<2x4xf32>, vector<2x4xf32>, vector<2x4xf32>, vector<2x4xf32> -> vector<2x64xf32>
    %86 = tpu.concatenate %84, %85 in 1 : vector<2x64xf32>, vector<2x64xf32> -> vector<2x128xf32>
    %c0_15 = arith.constant 0 : index
    %c0_16 = arith.constant 0 : index
    %c0_17 = arith.constant 0 : index
    %87 = vector.load %arg1[%c0_15, %c0_16, %c0_17] : memref<2x8x128xf32, #tpu.memory_space<vmem>>, vector<2x8x128xf32>
    %88 = vector.shape_cast %86 : vector<2x128xf32> to vector<2x1x128xf32>
    %89 = vector.broadcast %88 : vector<2x1x128xf32> to vector<2x8x128xf32>
    %90 = arith.mulf %87, %89 : vector<2x8x128xf32>
    %c0_18 = arith.constant 0 : index
    %c0_19 = arith.constant 0 : index
    %c0_20 = arith.constant 0 : index
    %91 = vector.load %arg6[%c0_18, %c0_19, %c0_20] : memref<2x8x128xf32, #tpu.memory_space<vmem>>, vector<2x8x128xf32>
    tpu.vector_store %arg6[%c0_18, %c0_19, %c0_20], %90 {strides = array<i32>} : memref<2x8x128xf32, #tpu.memory_space<vmem>>, vector<2x8x128xf32>,
    return
  }
  func.func @transform_0(%arg0: i32) -> (i32, i32, i32) {
    %c0_i32 = arith.constant 0 : i32
    %c0_i32_0 = arith.constant 0 : i32
    %c0_i32_1 = arith.constant 0 : i32
    return %arg0, %c0_i32, %c0_i32_0 : i32, i32, i32
  }
  func.func @transform_1(%arg0: i32) -> (i32, i32) {
    %c0_i32 = arith.constant 0 : i32
    %c0_i32_0 = arith.constant 0 : i32
    %c0_i32_1 = arith.constant 0 : i32
    return %c0_i32, %c0_i32_0 : i32, i32
  }
  func.func @transform_2(%arg0: i32) -> (i32, i32) {
    %c0_i32 = arith.constant 0 : i32
    %c0_i32_0 = arith.constant 0 : i32
    %c0_i32_1 = arith.constant 0 : i32
    return %c0_i32, %c0_i32_0 : i32, i32
  }
  func.func @transform_3(%arg0: i32) -> (i32, i32) {
    %c0_i32 = arith.constant 0 : i32
    %c0_i32_0 = arith.constant 0 : i32
    %c0_i32_1 = arith.constant 0 : i32
    return %c0_i32, %c0_i32_0 : i32, i32
  }
  func.func @transform_4(%arg0: i32) -> (i32, i32) {
    %c0_i32 = arith.constant 0 : i32
    %c0_i32_0 = arith.constant 0 : i32
    %c0_i32_1 = arith.constant 0 : i32
    return %c0_i32, %c0_i32_0 : i32, i32
  }
  func.func @transform_5(%arg0: i32) -> (i32, i32, i32) {
    %c0_i32 = arith.constant 0 : i32
    %c0_i32_0 = arith.constant 0 : i32
    %c0_i32_1 = arith.constant 0 : i32
    return %arg0, %c0_i32, %c0_i32_0 : i32, i32, i32
  }
}

module attributes {stable_mosaic.version = 11 : i64} {
  func.func @_se_fused_kernel(%arg0: i32, %arg1: memref<2x8x128xf32, #tpu.memory_space<vmem>>, %arg2: memref<4x2xf32, #tpu.memory_space<vmem>>, %arg3: memref<1x2xf32, #tpu.memory_space<vmem>>, %arg4: memref<2x4xf32, #tpu.memory_space<vmem>>, %arg5: memref<1x4xf32, #tpu.memory_space<vmem>>, %arg6: memref<2x8x128xf32, #tpu.memory_space<vmem>>) attributes {dimension_semantics = [#tpu.dimension_semantics<parallel>], iteration_bounds = array<i64: 1>, scalar_prefetch = 0 : i64, scratch_operands = 0 : i64, tpu.core_type = #tpu.core_type<tc>, window_params = [{transform_indices = @transform_0, window_bounds = array<i64: 2, 8, 128>}, {pipeline_mode = #tpu.pipeline_mode<synchronous>, transform_indices = @transform_1, window_bounds = array<i64: 4, 2>}, {pipeline_mode = #tpu.pipeline_mode<synchronous>, transform_indices = @transform_2, window_bounds = array<i64: 1, 2>}, {pipeline_mode = #tpu.pipeline_mode<synchronous>, transform_indices = @transform_3, window_bounds = array<i64: 2, 4>}, {pipeline_mode = #tpu.pipeline_mode<synchronous>, transform_indices = @transform_4, window_bounds = array<i64: 1, 4>}, {transform_indices = @transform_5, window_bounds = array<i64: 2, 8, 128>}]} {
    %c0 = arith.constant 0 : index
    %c0_0 = arith.constant 0 : index
    %c0_1 = arith.constant 0 : index
    %0 = vector.load %arg1[%c0, %c0_0, %c0_1] : memref<2x8x128xf32, #tpu.memory_space<vmem>>, vector<2x8x128xf32>
    %cst = arith.constant dense<0.000000e+00> : vector<2x128xf32>
    %1 = vector.multi_reduction <add>, %0, %cst [1] : vector<2x8x128xf32> to vector<2x128xf32>
    %2 = vector.extract_strided_slice %1 {offsets = [0, 0], sizes = [2, 4], strides = [1, 1]} : vector<2x128xf32> to vector<2x4xf32>
    %3 = vector.extract_strided_slice %1 {offsets = [0, 4], sizes = [2, 4], strides = [1, 1]} : vector<2x128xf32> to vector<2x4xf32>
    %4 = arith.addf %2, %3 : vector<2x4xf32>
    %5 = vector.extract_strided_slice %1 {offsets = [0, 8], sizes = [2, 4], strides = [1, 1]} : vector<2x128xf32> to vector<2x4xf32>
    %6 = arith.addf %4, %5 : vector<2x4xf32>
    %7 = vector.extract_strided_slice %1 {offsets = [0, 12], sizes = [2, 4], strides = [1, 1]} : vector<2x128xf32> to vector<2x4xf32>
    %8 = arith.addf %6, %7 : vector<2x4xf32>
    %9 = vector.extract_strided_slice %1 {offsets = [0, 16], sizes = [2, 4], strides = [1, 1]} : vector<2x128xf32> to vector<2x4xf32>
    %10 = arith.addf %8, %9 : vector<2x4xf32>
    %11 = vector.extract_strided_slice %1 {offsets = [0, 20], sizes = [2, 4], strides = [1, 1]} : vector<2x128xf32> to vector<2x4xf32>
    %12 = arith.addf %10, %11 : vector<2x4xf32>
    %13 = vector.extract_strided_slice %1 {offsets = [0, 24], sizes = [2, 4], strides = [1, 1]} : vector<2x128xf32> to vector<2x4xf32>
    %14 = arith.addf %12, %13 : vector<2x4xf32>
    %15 = vector.extract_strided_slice %1 {offsets = [0, 28], sizes = [2, 4], strides = [1, 1]} : vector<2x128xf32> to vector<2x4xf32>
    %16 = arith.addf %14, %15 : vector<2x4xf32>
    %17 = vector.extract_strided_slice %1 {offsets = [0, 32], sizes = [2, 4], strides = [1, 1]} : vector<2x128xf32> to vector<2x4xf32>
    %18 = arith.addf %16, %17 : vector<2x4xf32>
    %19 = vector.extract_strided_slice %1 {offsets = [0, 36], sizes = [2, 4], strides = [1, 1]} : vector<2x128xf32> to vector<2x4xf32>
    %20 = arith.addf %18, %19 : vector<2x4xf32>
    %21 = vector.extract_strided_slice %1 {offsets = [0, 40], sizes = [2, 4], strides = [1, 1]} : vector<2x128xf32> to vector<2x4xf32>
    %22 = arith.addf %20, %21 : vector<2x4xf32>
    %23 = vector.extract_strided_slice %1 {offsets = [0, 44], sizes = [2, 4], strides = [1, 1]} : vector<2x128xf32> to vector<2x4xf32>
    %24 = arith.addf %22, %23 : vector<2x4xf32>
    %25 = vector.extract_strided_slice %1 {offsets = [0, 48], sizes = [2, 4], strides = [1, 1]} : vector<2x128xf32> to vector<2x4xf32>
    %26 = arith.addf %24, %25 : vector<2x4xf32>
    %27 = vector.extract_strided_slice %1 {offsets = [0, 52], sizes = [2, 4], strides = [1, 1]} : vector<2x128xf32> to vector<2x4xf32>
    %28 = arith.addf %26, %27 : vector<2x4xf32>
    %29 = vector.extract_strided_slice %1 {offsets = [0, 56], sizes = [2, 4], strides = [1, 1]} : vector<2x128xf32> to vector<2x4xf32>
    %30 = arith.addf %28, %29 : vector<2x4xf32>
    %31 = vector.extract_strided_slice %1 {offsets = [0, 60], sizes = [2, 4], strides = [1, 1]} : vector<2x128xf32> to vector<2x4xf32>
    %32 = arith.addf %30, %31 : vector<2x4xf32>
    %33 = vector.extract_strided_slice %1 {offsets = [0, 64], sizes = [2, 4], strides = [1, 1]} : vector<2x128xf32> to vector<2x4xf32>
    %34 = arith.addf %32, %33 : vector<2x4xf32>
    %35 = vector.extract_strided_slice %1 {offsets = [0, 68], sizes = [2, 4], strides = [1, 1]} : vector<2x128xf32> to vector<2x4xf32>
    %36 = arith.addf %34, %35 : vector<2x4xf32>
    %37 = vector.extract_strided_slice %1 {offsets = [0, 72], sizes = [2, 4], strides = [1, 1]} : vector<2x128xf32> to vector<2x4xf32>
    %38 = arith.addf %36, %37 : vector<2x4xf32>
    %39 = vector.extract_strided_slice %1 {offsets = [0, 76], sizes = [2, 4], strides = [1, 1]} : vector<2x128xf32> to vector<2x4xf32>
    %40 = arith.addf %38, %39 : vector<2x4xf32>
    %41 = vector.extract_strided_slice %1 {offsets = [0, 80], sizes = [2, 4], strides = [1, 1]} : vector<2x128xf32> to vector<2x4xf32>
    %42 = arith.addf %40, %41 : vector<2x4xf32>
    %43 = vector.extract_strided_slice %1 {offsets = [0, 84], sizes = [2, 4], strides = [1, 1]} : vector<2x128xf32> to vector<2x4xf32>
    %44 = arith.addf %42, %43 : vector<2x4xf32>
    %45 = vector.extract_strided_slice %1 {offsets = [0, 88], sizes = [2, 4], strides = [1, 1]} : vector<2x128xf32> to vector<2x4xf32>
    %46 = arith.addf %44, %45 : vector<2x4xf32>
    %47 = vector.extract_strided_slice %1 {offsets = [0, 92], sizes = [2, 4], strides = [1, 1]} : vector<2x128xf32> to vector<2x4xf32>
    %48 = arith.addf %46, %47 : vector<2x4xf32>
    %49 = vector.extract_strided_slice %1 {offsets = [0, 96], sizes = [2, 4], strides = [1, 1]} : vector<2x128xf32> to vector<2x4xf32>
    %50 = arith.addf %48, %49 : vector<2x4xf32>
    %51 = vector.extract_strided_slice %1 {offsets = [0, 100], sizes = [2, 4], strides = [1, 1]} : vector<2x128xf32> to vector<2x4xf32>
    %52 = arith.addf %50, %51 : vector<2x4xf32>
    %53 = vector.extract_strided_slice %1 {offsets = [0, 104], sizes = [2, 4], strides = [1, 1]} : vector<2x128xf32> to vector<2x4xf32>
    %54 = arith.addf %52, %53 : vector<2x4xf32>
    %55 = vector.extract_strided_slice %1 {offsets = [0, 108], sizes = [2, 4], strides = [1, 1]} : vector<2x128xf32> to vector<2x4xf32>
    %56 = arith.addf %54, %55 : vector<2x4xf32>
    %57 = vector.extract_strided_slice %1 {offsets = [0, 112], sizes = [2, 4], strides = [1, 1]} : vector<2x128xf32> to vector<2x4xf32>
    %58 = arith.addf %56, %57 : vector<2x4xf32>
    %59 = vector.extract_strided_slice %1 {offsets = [0, 116], sizes = [2, 4], strides = [1, 1]} : vector<2x128xf32> to vector<2x4xf32>
    %60 = arith.addf %58, %59 : vector<2x4xf32>
    %61 = vector.extract_strided_slice %1 {offsets = [0, 120], sizes = [2, 4], strides = [1, 1]} : vector<2x128xf32> to vector<2x4xf32>
    %62 = arith.addf %60, %61 : vector<2x4xf32>
    %63 = vector.extract_strided_slice %1 {offsets = [0, 124], sizes = [2, 4], strides = [1, 1]} : vector<2x128xf32> to vector<2x4xf32>
    %64 = arith.addf %62, %63 : vector<2x4xf32>
    %cst_2 = arith.constant 3.906250e-03 : f32
    %65 = vector.broadcast %cst_2 : f32 to vector<2x4xf32>
    %66 = arith.mulf %64, %65 : vector<2x4xf32>
    %c0_3 = arith.constant 0 : index
    %c0_4 = arith.constant 0 : index
    %67 = vector.load %arg2[%c0_3, %c0_4] : memref<4x2xf32, #tpu.memory_space<vmem>>, vector<4x2xf32>
    %cst_5 = arith.constant dense<0.000000e+00> : vector<2x2xf32>
    %68 = tpu.matmul %66, %67, %cst_5 {dimension_numbers = #tpu.dot_dimension_numbers<[1], [0], [0], [1], [0, 0, 1, 1], [], []>} : vector<2x4xf32>, vector<4x2xf32>, vector<2x2xf32> -> vector<2x2xf32>
    %c0_6 = arith.constant 0 : index
    %c0_7 = arith.constant 0 : index
    %69 = vector.load %arg3[%c0_6, %c0_7] : memref<1x2xf32, #tpu.memory_space<vmem>>, vector<1x2xf32>
    %70 = vector.broadcast %69 : vector<1x2xf32> to vector<2x2xf32>
    %71 = arith.addf %68, %70 : vector<2x2xf32>
    %cst_8 = arith.constant 0.000000e+00 : f32
    %72 = vector.broadcast %cst_8 : f32 to vector<2x2xf32>
    %73 = arith.maximumf %71, %72 : vector<2x2xf32>
    %c0_9 = arith.constant 0 : index
    %c0_10 = arith.constant 0 : index
    %74 = vector.load %arg4[%c0_9, %c0_10] : memref<2x4xf32, #tpu.memory_space<vmem>>, vector<2x4xf32>
    %cst_11 = arith.constant dense<0.000000e+00> : vector<2x4xf32>
    %75 = tpu.matmul %73, %74, %cst_11 {dimension_numbers = #tpu.dot_dimension_numbers<[1], [0], [0], [1], [0, 0, 1, 1], [], []>} : vector<2x2xf32>, vector<2x4xf32>, vector<2x4xf32> -> vector<2x4xf32>
    %c0_12 = arith.constant 0 : index
    %c0_13 = arith.constant 0 : index
    %76 = vector.load %arg5[%c0_12, %c0_13] : memref<1x4xf32, #tpu.memory_space<vmem>>, vector<1x4xf32>
    %77 = vector.broadcast %76 : vector<1x4xf32> to vector<2x4xf32>
    %78 = arith.addf %75, %77 : vector<2x4xf32>
    %79 = arith.negf %78 : vector<2x4xf32>
    %80 = math.exp %79 : vector<2x4xf32>
    %cst_14 = arith.constant 1.000000e+00 : f32
    %81 = vector.broadcast %cst_14 : f32 to vector<2x4xf32>
    %82 = arith.addf %81, %80 : vector<2x4xf32>
    %83 = arith.divf %81, %82 : vector<2x4xf32>
    %84 = tpu.concatenate %83, %83, %83, %83, %83, %83, %83, %83, %83, %83, %83, %83, %83, %83, %83, %83 in 1 : vector<2x4xf32>, vector<2x4xf32>, vector<2x4xf32>, vector<2x4xf32>, vector<2x4xf32>, vector<2x4xf32>, vector<2x4xf32>, vector<2x4xf32>, vector<2x4xf32>, vector<2x4xf32>, vector<2x4xf32>, vector<2x4xf32>, vector<2x4xf32>, vector<2x4xf32>, vector<2x4xf32>, vector<2x4xf32> -> vector<2x64xf32>
    %85 = tpu.concatenate %83, %83, %83, %83, %83, %83, %83, %83, %83, %83, %83, %83, %83, %83, %83, %83 in 1 : vector<2x4xf32>, vector<2x4xf32>, vector<2x4xf32>, vector<2x4xf32>, vector<2x4xf32>, vector<2x4xf32>, vector<2x4xf32>, vector<2x4xf32>, vector<2x4xf32>, vector<2x4xf32>, vector<2x4xf32>, vector<2x4xf32>, vector<2x4xf32>, vector<2x4xf32>, vector<2x4xf32>, vector<2x4xf32> -> vector<2x64xf32>
    %86 = tpu.concatenate %84, %85 in 1 : vector<2x64xf32>, vector<2x64xf32> -> vector<2x128xf32>
    %c0_15 = arith.constant 0 : index
    %c0_16 = arith.constant 0 : index
    %c0_17 = arith.constant 0 : index
    %87 = vector.load %arg1[%c0_15, %c0_16, %c0_17] : memref<2x8x128xf32, #tpu.memory_space<vmem>>, vector<2x8x128xf32>
    %88 = vector.shape_cast %86 : vector<2x128xf32> to vector<2x1x128xf32>
    %89 = vector.broadcast %88 : vector<2x1x128xf32> to vector<2x8x128xf32>
    %90 = arith.mulf %87, %89 : vector<2x8x128xf32>
    %c0_18 = arith.constant 0 : index
    %c0_19 = arith.constant 0 : index
    %c0_20 = arith.constant 0 : index
    %91 = vector.load %arg6[%c0_18, %c0_19, %c0_20] : memref<2x8x128xf32, #tpu.memory_space<vmem>>, vector<2x8x128xf32>
    tpu.vector_store %arg6[%c0_18, %c0_19, %c0_20], %90 {strides = array<i32>} : memref<2x8x128xf32, #tpu.memory_space<vmem>>, vector<2x8x128xf32>,
    return
  }
  func.func @transform_0(%arg0: i32) -> (i32, i32, i32) {
    %c0_i32 = arith.constant 0 : i32
    %c0_i32_0 = arith.constant 0 : i32
    %c0_i32_1 = arith.constant 0 : i32
    return %arg0, %c0_i32, %c0_i32_0 : i32, i32, i32
  }
  func.func @transform_1(%arg0: i32) -> (i32, i32) {
    %c0_i32 = arith.constant 0 : i32
    %c0_i32_0 = arith.constant 0 : i32
    %c0_i32_1 = arith.constant 0 : i32
    return %c0_i32, %c0_i32_0 : i32, i32
  }
  func.func @transform_2(%arg0: i32) -> (i32, i32) {
    %c0_i32 = arith.constant 0 : i32
    %c0_i32_0 = arith.constant 0 : i32
    %c0_i32_1 = arith.constant 0 : i32
    return %c0_i32, %c0_i32_0 : i32, i32
  }
  func.func @transform_3(%arg0: i32) -> (i32, i32) {
    %c0_i32 = arith.constant 0 : i32
    %c0_i32_0 = arith.constant 0 : i32
    %c0_i32_1 = arith.constant 0 : i32
    return %c0_i32, %c0_i32_0 : i32, i32
  }
  func.func @transform_4(%arg0: i32) -> (i32, i32) {
    %c0_i32 = arith.constant 0 : i32
    %c0_i32_0 = arith.constant 0 : i32
    %c0_i32_1 = arith.constant 0 : i32
    return %c0_i32, %c0_i32_0 : i32, i32
  }
  func.func @transform_5(%arg0: i32) -> (i32, i32, i32) {
    %c0_i32 = arith.constant 0 : i32
    %c0_i32_0 = arith.constant 0 : i32
    %c0_i32_1 = arith.constant 0 : i32
    return %arg0, %c0_i32, %c0_i32_0 : i32, i32, i32
  }
}

</mosaic_0001>

<llo_original>
// kernel: tpu_custom_call.1
$region0: #{tpu_custom_call.1}
  #allocation0 [shape = 'u32[]', space=smem, size = 0x4, offset = 0x4, fixed_abs, tag = 'smem constant byte address 0x4 - core index']
  #allocation1 [shape = 'u32[144,128]{1,0:T(1,128)}', space=vmem, size = 0x12000, scoped, tag = 'internal scratch']
  %s0 = inlined_call_operand.hbm [shape: f32[2,8,128], index: 0, kind: input, shape index: {}]
  %s1 = inlined_call_operand.vmem [shape: f32[4,2], index: 1, kind: input, shape index: {}]
  %s2 = inlined_call_operand.vmem [shape: f32[1,2], index: 2, kind: input, shape index: {}]
  %s3 = inlined_call_operand.vmem [shape: f32[2,4], index: 3, kind: input, shape index: {}]
  %s4 = inlined_call_operand.vmem [shape: f32[1,4], index: 4, kind: input, shape index: {}]
  %s5 = inlined_call_operand.hbm [shape: f32[2,8,128], index: 5, kind: output, shape index: {}]
  %s6 = sld [smem:[#allocation0]]
  $region34: #{tpu_custom_call.1} parent=0
    _
  %s8 = ssub.s32 1, %s6
  %s9 = scalar_select 0, %s8, %s6
  $region1: #{tpu_custom_call.1} parent=0
    #allocation2 [shape = 'u8[8192]{0}', space=vmem, size = 0x2000, scoped, tag = 'input window, operand 0, single buffered']
    #allocation3 [shape = 's32[1]{0}', space=sflag, size = 0x4, scoped, tag = 'scoped memory for tpu_custom_call.1']
    #allocation4 [shape = 's32[1]{0}', space=sflag, size = 0x4, scoped, tag = 'scoped memory for tpu_custom_call.1']
    #allocation5 [shape = 'u8[8192]{0}', space=vmem, size = 0x2000, scoped, tag = 'output window, operand 0, single buffered']
    %10 = vsyncpa [#allocation3], 0
    %11 = vsyncpa [#allocation4], 0
    // Predicated region
    $region2: #{tpu_custom_call.1} parent=1 // pred_check
      _
    $region3: #{tpu_custom_call.1} parent=1 // pred_check_branch
      %13 = sbr.rel (0) target = $region5
    $region4: #{tpu_custom_call.1} parent=1 // pred_region
      %s15 = ssub.s32 256, 256
      %16 = vsyncadd [#allocation3], %s15
      %s17 = sshll.u32 [#allocation2], 4
      %s18 = int_to_ptr.vmem [resolvable:$true] %s17
      %23 = dma.hbm_to_vmem [thread:$0]  %s0, 256, %s18, [#allocation3], 128, 128, 8
    $region5: #{tpu_custom_call.1} parent=1 // pred_fallthru
      _
    // Predicated region
    $region6: #{tpu_custom_call.1} parent=1 // pred_check
      _
    $region7: #{tpu_custom_call.1} parent=1 // pred_check_branch
      %25 = sbr.rel (0) target = $region9
    $region8: #{tpu_custom_call.1} parent=1 // pred_region
      _
    $region9: #{tpu_custom_call.1} parent=1 // pred_fallthru
      _
    // Predicated region
    $region10: #{tpu_custom_call.1} parent=1 // pred_check
      _
    $region11: #{tpu_custom_call.1} parent=1 // pred_check_branch
      %27 = sbr.rel (0) target = $region13
    $region12: #{tpu_custom_call.1} parent=1 // pred_region
      _
    $region13: #{tpu_custom_call.1} parent=1 // pred_fallthru
      _
    // Predicated region
    $region14: #{tpu_custom_call.1} parent=1 // pred_check
      _
    $region15: #{tpu_custom_call.1} parent=1 // pred_check_branch
      %29 = sbr.rel (0) target = $region17
    $region16: #{tpu_custom_call.1} parent=1 // pred_region
      _
    $region17: #{tpu_custom_call.1} parent=1 // pred_fallthru
      _
    // Predicated region
    $region18: #{tpu_custom_call.1} parent=1 // pred_check
      _
    $region19: #{tpu_custom_call.1} parent=1 // pred_check_branch
      %31 = sbr.rel (0) target = $region21
    $region20: #{tpu_custom_call.1} parent=1 // pred_region
      _
    $region21: #{tpu_custom_call.1} parent=1 // pred_fallthru
      _
    // Predicated region
    $region22: #{tpu_custom_call.1} parent=1 // pred_check
      _
    $region23: #{tpu_custom_call.1} parent=1 // pred_check_branch
      %33 = sbr.rel (0) target = $region25
    $region24: #{tpu_custom_call.1} parent=1 // pred_region
      %34 = dma.done [#allocation3], 256
    $region25: #{tpu_custom_call.1} parent=1 // pred_fallthru
      _
    %v35 = vld [vmem:[#allocation2] sm:$0xff]
    %v36 = vld [vmem:[#allocation2 + $0x8] sm:$0xff]
    %v37 = vrot.slane %v35, 4
    %v38 = vadd.f32 %v35, %v37
    %v39 = vrot.slane %v38, 2
    %v40 = vadd.f32 %v38, %v39
    %v41 = vrot.slane %v40, 1
    %v42 = vadd.f32 %v40, %v41
    %v43 = vrot.slane %v36, 4
    %v44 = vadd.f32 %v36, %v43
    %v45 = vrot.slane %v44, 2
    %v46 = vadd.f32 %v44, %v45
    %v47 = vrot.slane %v46, 1
    %v48 = vadd.f32 %v46, %v47
    %51 = vrot.lane.b32.xlu0 %v42, 124
    %v52 = vpop.permute.xlu0 %51
    %53 = vrot.lane.b32.xlu0 %v48, 124
    %v54 = vpop.permute.xlu0 %53
    %v57 = vadd.f32 %v42, %v52
    %v58 = vadd.f32 %v48, %v54
    %59 = vrot.lane.b32.xlu0 %v42, 120
    %v60 = vpop.permute.xlu0 %59
    %61 = vrot.lane.b32.xlu0 %v48, 120
    %v62 = vpop.permute.xlu0 %61
    %v65 = vadd.f32 %v57, %v60
    %v66 = vadd.f32 %v58, %v62
    %67 = vrot.lane.b32.xlu0 %v42, 116
    %v68 = vpop.permute.xlu0 %67
    %69 = vrot.lane.b32.xlu0 %v48, 116
    %v70 = vpop.permute.xlu0 %69
    %v73 = vadd.f32 %v65, %v68
    %v74 = vadd.f32 %v66, %v70
    %75 = vrot.lane.b32.xlu0 %v42, 112
    %v76 = vpop.permute.xlu0 %75
    %77 = vrot.lane.b32.xlu0 %v48, 112
    %v78 = vpop.permute.xlu0 %77
    %v81 = vadd.f32 %v73, %v76
    %v82 = vadd.f32 %v74, %v78
    %83 = vrot.lane.b32.xlu0 %v42, 108
    %v84 = vpop.permute.xlu0 %83
    %85 = vrot.lane.b32.xlu0 %v48, 108
    %v86 = vpop.permute.xlu0 %85
    %v89 = vadd.f32 %v81, %v84
    %v90 = vadd.f32 %v82, %v86
    %91 = vrot.lane.b32.xlu0 %v42, 104
    %v92 = vpop.permute.xlu0 %91
    %93 = vrot.lane.b32.xlu0 %v48, 104
    %v94 = vpop.permute.xlu0 %93
    %v97 = vadd.f32 %v89, %v92
    %v98 = vadd.f32 %v90, %v94
    %99 = vrot.lane.b32.xlu0 %v42, 100
    %v100 = vpop.permute.xlu0 %99
    %101 = vrot.lane.b32.xlu0 %v48, 100
    %v102 = vpop.permute.xlu0 %101
    %v105 = vadd.f32 %v97, %v100
    %v106 = vadd.f32 %v98, %v102
    %107 = vrot.lane.b32.xlu0 %v42, 96
    %v108 = vpop.permute.xlu0 %107
    %109 = vrot.lane.b32.xlu0 %v48, 96
    %v110 = vpop.permute.xlu0 %109
    %v113 = vadd.f32 %v105, %v108
    %v114 = vadd.f32 %v106, %v110
    %115 = vrot.lane.b32.xlu0 %v42, 92
    %v116 = vpop.permute.xlu0 %115
    %117 = vrot.lane.b32.xlu0 %v48, 92
    %v118 = vpop.permute.xlu0 %117
    %v121 = vadd.f32 %v113, %v116
    %v122 = vadd.f32 %v114, %v118
    %123 = vrot.lane.b32.xlu0 %v42, 88
    %v124 = vpop.permute.xlu0 %123
    %125 = vrot.lane.b32.xlu0 %v48, 88
    %v126 = vpop.permute.xlu0 %125
    %v129 = vadd.f32 %v121, %v124
    %v130 = vadd.f32 %v122, %v126
    %131 = vrot.lane.b32.xlu0 %v42, 84
    %v132 = vpop.permute.xlu0 %131
    %133 = vrot.lane.b32.xlu0 %v48, 84
    %v134 = vpop.permute.xlu0 %133
    %v137 = vadd.f32 %v129, %v132
    %v138 = vadd.f32 %v130, %v134
    %139 = vrot.lane.b32.xlu0 %v42, 80
    %v140 = vpop.permute.xlu0 %139
    %141 = vrot.lane.b32.xlu0 %v48, 80
    %v142 = vpop.permute.xlu0 %141
    %v145 = vadd.f32 %v137, %v140
    %v146 = vadd.f32 %v138, %v142
    %147 = vrot.lane.b32.xlu0 %v42, 76
    %v148 = vpop.permute.xlu0 %147
    %149 = vrot.lane.b32.xlu0 %v48, 76
    %v150 = vpop.permute.xlu0 %149
    %v153 = vadd.f32 %v145, %v148
    %v154 = vadd.f32 %v146, %v150
    %155 = vrot.lane.b32.xlu0 %v42, 72
    %v156 = vpop.permute.xlu0 %155
    %157 = vrot.lane.b32.xlu0 %v48, 72
    %v158 = vpop.permute.xlu0 %157
    %v161 = vadd.f32 %v153, %v156
    %v162 = vadd.f32 %v154, %v158
    %163 = vrot.lane.b32.xlu0 %v42, 68
    %v164 = vpop.permute.xlu0 %163
    %165 = vrot.lane.b32.xlu0 %v48, 68
    %v166 = vpop.permute.xlu0 %165
    %v169 = vadd.f32 %v161, %v164
    %v170 = vadd.f32 %v162, %v166
    %171 = vrot.lane.b32.xlu0 %v42, 64
    %v172 = vpop.permute.xlu0 %171
    %173 = vrot.lane.b32.xlu0 %v48, 64
    %v174 = vpop.permute.xlu0 %173
    %v177 = vadd.f32 %v169, %v172
    %v178 = vadd.f32 %v170, %v174
    %179 = vrot.lane.b32.xlu0 %v42, 60
    %v180 = vpop.permute.xlu0 %179
    %181 = vrot.lane.b32.xlu0 %v48, 60
    %v182 = vpop.permute.xlu0 %181
    %v185 = vadd.f32 %v177, %v180
    %v186 = vadd.f32 %v178, %v182
    %187 = vrot.lane.b32.xlu0 %v42, 56
    %v188 = vpop.permute.xlu0 %187
    %189 = vrot.lane.b32.xlu0 %v48, 56
    %v190 = vpop.permute.xlu0 %189
    %v193 = vadd.f32 %v185, %v188
    %v194 = vadd.f32 %v186, %v190
    %195 = vrot.lane.b32.xlu0 %v42, 52
    %v196 = vpop.permute.xlu0 %195
    %197 = vrot.lane.b32.xlu0 %v48, 52
    %v198 = vpop.permute.xlu0 %197
    %v201 = vadd.f32 %v193, %v196
    %v202 = vadd.f32 %v194, %v198
    %203 = vrot.lane.b32.xlu0 %v42, 48
    %v204 = vpop.permute.xlu0 %203
    %205 = vrot.lane.b32.xlu0 %v48, 48
    %v206 = vpop.permute.xlu0 %205
    %v209 = vadd.f32 %v201, %v204
    %v210 = vadd.f32 %v202, %v206
    %211 = vrot.lane.b32.xlu0 %v42, 44
    %v212 = vpop.permute.xlu0 %211
    %213 = vrot.lane.b32.xlu0 %v48, 44
    %v214 = vpop.permute.xlu0 %213
    %v217 = vadd.f32 %v209, %v212
    %v218 = vadd.f32 %v210, %v214
    %219 = vrot.lane.b32.xlu0 %v42, 40
    %v220 = vpop.permute.xlu0 %219
    %221 = vrot.lane.b32.xlu0 %v48, 40
    %v222 = vpop.permute.xlu0 %221
    %v225 = vadd.f32 %v217, %v220
    %v226 = vadd.f32 %v218, %v222
    %227 = vrot.lane.b32.xlu0 %v42, 36
    %v228 = vpop.permute.xlu0 %227
    %229 = vrot.lane.b32.xlu0 %v48, 36
    %v230 = vpop.permute.xlu0 %229
    %v233 = vadd.f32 %v225, %v228
    %v234 = vadd.f32 %v226, %v230
    %235 = vrot.lane.b32.xlu0 %v42, 32
    %v236 = vpop.permute.xlu0 %235
    %237 = vrot.lane.b32.xlu0 %v48, 32
    %v238 = vpop.permute.xlu0 %237
    %v241 = vadd.f32 %v233, %v236
    %v242 = vadd.f32 %v234, %v238
    %243 = vrot.lane.b32.xlu0 %v42, 28
    %v244 = vpop.permute.xlu0 %243
    %245 = vrot.lane.b32.xlu0 %v48, 28
    %v246 = vpop.permute.xlu0 %245
    %v249 = vadd.f32 %v241, %v244
    %v250 = vadd.f32 %v242, %v246
    %251 = vrot.lane.b32.xlu0 %v42, 24
    %v252 = vpop.permute.xlu0 %251
    %253 = vrot.lane.b32.xlu0 %v48, 24
    %v254 = vpop.permute.xlu0 %253
    %v257 = vadd.f32 %v249, %v252
    %v258 = vadd.f32 %v250, %v254
    %259 = vrot.lane.b32.xlu0 %v42, 20
    %v260 = vpop.permute.xlu0 %259
    %261 = vrot.lane.b32.xlu0 %v48, 20
    %v262 = vpop.permute.xlu0 %261
    %v265 = vadd.f32 %v257, %v260
    %v266 = vadd.f32 %v258, %v262
    %267 = vrot.lane.b32.xlu0 %v42, 16
    %v268 = vpop.permute.xlu0 %267
    %269 = vrot.lane.b32.xlu0 %v48, 16
    %v270 = vpop.permute.xlu0 %269
    %v273 = vadd.f32 %v265, %v268
    %v274 = vadd.f32 %v266, %v270
    %275 = vrot.lane.b32.xlu0 %v42, 12
    %v276 = vpop.permute.xlu0 %275
    %277 = vrot.lane.b32.xlu0 %v48, 12
    %v278 = vpop.permute.xlu0 %277
    %v281 = vadd.f32 %v273, %v276
    %v282 = vadd.f32 %v274, %v278
    %283 = vrot.lane.b32.xlu0 %v42, 8
    %v284 = vpop.permute.xlu0 %283
    %285 = vrot.lane.b32.xlu0 %v48, 8
    %v286 = vpop.permute.xlu0 %285
    %v289 = vadd.f32 %v281, %v284
    %v290 = vadd.f32 %v282, %v286
    %291 = vrot.lane.b32.xlu0 %v42, 4
    %v292 = vpop.permute.xlu0 %291
    %293 = vrot.lane.b32.xlu0 %v48, 4
    %v294 = vpop.permute.xlu0 %293
    %v297 = vadd.f32 %v289, %v292
    %v298 = vadd.f32 %v290, %v294
    %v299 = vmul.f32 %v297, 0.00390625
    %v300 = vmul.f32 %v298, 0.00390625
    %v301 = vld [vmem:[%s1] sm:$0xf]
    %v302 = vld [vmem:[%s2] sm:$0x1]
    %v304 = vlaneseq
    %v305 = vshrl.u32 %v304, 7
    %v306 = vsub.s32 0, %v305
    %v307 = vrot.slane %v302, %v306
    %v311 = vrot.slane %v300, 7
    %vm312 = vcmask 1041409
    %v313 = vsel %vm312, %v311, %v299
    %vm314 = vcmask 31744
    %v315 = vsel %vm314, %v313, 0
    %vm317 = vcmask 1043456
    %v319 = vsel %vm317, %v301, 0
    %321 = vmatprep.subr.mxu0 0.0
    %322 = vmatpush1.msra.mxu0 %v319
    %323 = vmatprep.subr.mxu0 0.0
    %324 = vmatpush1.msra.mxu0 0.0
    %325 = vmatprep.subr.mxu0 0.0
    %326 = vmatpush1.msra.mxu0 0.0
    %327 = vmatprep.subr.mxu0 0.0
    %328 = vmatpush1.msra.mxu0 0.0
    %329 = vmatprep.subr.mxu0 0.0
    %330 = vmatpush1.msra.mxu0 0.0
    %331 = vmatprep.subr.mxu0 0.0
    %332 = vmatpush1.msra.mxu0 0.0
    %333 = vmatprep.subr.mxu0 0.0
    %334 = vmatpush1.msra.mxu0 0.0
    %335 = vmatprep.subr.mxu0 0.0
    %336 = vmatpush1.msra.mxu0 0.0
    %337 = vmatprep.subr.mxu0 0.0
    %338 = vmatpush1.msra.mxu0 0.0
    %339 = vmatprep.subr.mxu0 0.0
    %340 = vmatpush1.msra.mxu0 0.0
    %341 = vmatprep.subr.mxu0 0.0
    %342 = vmatpush1.msra.mxu0 0.0
    %343 = vmatprep.subr.mxu0 0.0
    %344 = vmatpush1.msra.mxu0 0.0
    %345 = vmatprep.subr.mxu0 0.0
    %346 = vmatpush1.msra.mxu0 0.0
    %347 = vmatprep.subr.mxu0 0.0
    %348 = vmatpush1.msra.mxu0 0.0
    %349 = vmatprep.subr.mxu0 0.0
    %350 = vmatpush1.msra.mxu0 0.0
    %351 = vmatprep.subr.mxu0 0.0
    %352 = vmatpush1.msra.mxu0 0.0
    %353 = vmatprep.subr.mxu0 0.0
    %354 = vmatpush1.msra.mxu0 0.0
    %355 = vmatprep.subr.mxu0 0.0
    %356 = vmatpush1.msra.mxu0 0.0
    %357 = vmatprep.subr.mxu0 0.0
    %358 = vmatpush1.msra.mxu0 0.0
    %359 = vmatprep.subr.mxu0 0.0
    %360 = vmatpush1.msra.mxu0 0.0
    %361 = vmatprep.subr.mxu0 0.0
    %362 = vmatpush1.msra.mxu0 0.0
    %363 = vmatprep.subr.mxu0 0.0
    %364 = vmatpush1.msra.mxu0 0.0
    %365 = vmatprep.subr.mxu0 0.0
    %366 = vmatpush1.msra.mxu0 0.0
    %367 = vmatprep.subr.mxu0 0.0
    %368 = vmatpush1.msra.mxu0 0.0
    %369 = vmatprep.subr.mxu0 0.0
    %370 = vmatpush1.msra.mxu0 0.0
    %371 = vmatprep.subr.mxu0 0.0
    %372 = vmatpush1.msra.mxu0 0.0
    %373 = vmatprep.subr.mxu0 0.0
    %374 = vmatpush1.msra.mxu0 0.0
    %375 = vmatprep.subr.mxu0 0.0
    %376 = vmatpush1.msra.mxu0 0.0
    %377 = vmatprep.subr.mxu0 0.0
    %378 = vmatpush1.msra.mxu0 0.0
    %379 = vmatprep.subr.mxu0 0.0
    %380 = vmatpush1.msra.mxu0 0.0
    %381 = vmatprep.subr.mxu0 0.0
    %382 = vmatpush1.msra.mxu0 0.0
    %383 = vmatprep.subr.mxu0 0.0
    %384 = vmatpush1.msra.mxu0 0.0
    %385 = vmatprep.mubr.f32.mxu0 0.0
    %386 = vmatmul.mubr.f32.gmra.mrb[0].mxu0 %v315
    %v387 = vpop.f32.mrb[0].mxu0
    %v388 = vadd.f32 %v307, %v387
    %v389 = vpop.f32.mrb[0].mxu0
    %390 = vdwg.mxu0
    %v391 = vmax.f32 %v388, 0.0
    %v392 = vld [vmem:[%s3] sm:$0x3]
    %v393 = vld [vmem:[%s4] sm:$0x1]
    %v395 = vlaneseq
    %v396 = vshrl.u32 %v395, 7
    %v397 = vsub.s32 0, %v396
    %v398 = vrot.slane %v393, %v397
    %vm400 = vcmask 15360
    %v402 = vsel %vm400, %v391, 0
    %vm404 = vcmask 1041408
    %v406 = vsel %vm404, %v392, 0
    %408 = vmatprep.subr.mxu0 0.0
    %409 = vmatpush1.msra.mxu0 %v406
    %410 = vmatprep.subr.mxu0 0.0
    %411 = vmatpush1.msra.mxu0 0.0
    %412 = vmatprep.subr.mxu0 0.0
    %413 = vmatpush1.msra.mxu0 0.0
    %414 = vmatprep.subr.mxu0 0.0
    %415 = vmatpush1.msra.mxu0 0.0
    %416 = vmatprep.subr.mxu0 0.0
    %417 = vmatpush1.msra.mxu0 0.0
    %418 = vmatprep.subr.mxu0 0.0
    %419 = vmatpush1.msra.mxu0 0.0
    %420 = vmatprep.subr.mxu0 0.0
    %421 = vmatpush1.msra.mxu0 0.0
    %422 = vmatprep.subr.mxu0 0.0
    %423 = vmatpush1.msra.mxu0 0.0
    %424 = vmatprep.subr.mxu0 0.0
    %425 = vmatpush1.msra.mxu0 0.0
    %426 = vmatprep.subr.mxu0 0.0
    %427 = vmatpush1.msra.mxu0 0.0
    %428 = vmatprep.subr.mxu0 0.0
    %429 = vmatpush1.msra.mxu0 0.0
    %430 = vmatprep.subr.mxu0 0.0
    %431 = vmatpush1.msra.mxu0 0.0
    %432 = vmatprep.subr.mxu0 0.0
    %433 = vmatpush1.msra.mxu0 0.0
    %434 = vmatprep.subr.mxu0 0.0
    %435 = vmatpush1.msra.mxu0 0.0
    %436 = vmatprep.subr.mxu0 0.0
    %437 = vmatpush1.msra.mxu0 0.0
    %438 = vmatprep.subr.mxu0 0.0
    %439 = vmatpush1.msra.mxu0 0.0
    %440 = vmatprep.subr.mxu0 0.0
    %441 = vmatpush1.msra.mxu0 0.0
    %442 = vmatprep.subr.mxu0 0.0
    %443 = vmatpush1.msra.mxu0 0.0
    %444 = vmatprep.subr.mxu0 0.0
    %445 = vmatpush1.msra.mxu0 0.0
    %446 = vmatprep.subr.mxu0 0.0
    %447 = vmatpush1.msra.mxu0 0.0
    %448 = vmatprep.subr.mxu0 0.0
    %449 = vmatpush1.msra.mxu0 0.0
    %450 = vmatprep.subr.mxu0 0.0
    %451 = vmatpush1.msra.mxu0 0.0
    %452 = vmatprep.subr.mxu0 0.0
    %453 = vmatpush1.msra.mxu0 0.0
    %454 = vmatprep.subr.mxu0 0.0
    %455 = vmatpush1.msra.mxu0 0.0
    %456 = vmatprep.subr.mxu0 0.0
    %457 = vmatpush1.msra.mxu0 0.0
    %458 = vmatprep.subr.mxu0 0.0
    %459 = vmatpush1.msra.mxu0 0.0
    %460 = vmatprep.subr.mxu0 0.0
    %461 = vmatpush1.msra.mxu0 0.0
    %462 = vmatprep.subr.mxu0 0.0
    %463 = vmatpush1.msra.mxu0 0.0
    %464 = vmatprep.subr.mxu0 0.0
    %465 = vmatpush1.msra.mxu0 0.0
    %466 = vmatprep.subr.mxu0 0.0
    %467 = vmatpush1.msra.mxu0 0.0
    %468 = vmatprep.subr.mxu0 0.0
    %469 = vmatpush1.msra.mxu0 0.0
    %470 = vmatprep.subr.mxu0 0.0
    %471 = vmatpush1.msra.mxu0 0.0
    %472 = vmatprep.mubr.f32.mxu0 0.0
    %473 = vmatmul.mubr.f32.gmra.mrb[0].mxu0 %v402
    %v474 = vpop.f32.mrb[0].mxu0
    %v475 = vadd.f32 %v398, %v474
    %v476 = vpop.f32.mrb[0].mxu0
    %477 = vdwg.mxu0
    %v478 = vxor.u32 %v475, 2147483648
    %v479 = vmul.f32 %v478, 1.442695
    %v480 = vpow.pop %v479
    %v481 = vadd.f32 %v480, 1.0
    %v482 = vrcp.pop %v481
    %v483 = vmul.f32 1.0, %v482
    %485 = vrot.lane.b32.xlu0 %v483, 4
    %v486 = vpop.permute.xlu0 %485
    %488 = vrot.lane.b32.xlu0 %v483, 8
    %v489 = vpop.permute.xlu0 %488
    %491 = vrot.lane.b32.xlu0 %v483, 12
    %v492 = vpop.permute.xlu0 %491
    %494 = vrot.lane.b32.xlu0 %v483, 16
    %v495 = vpop.permute.xlu0 %494
    %497 = vrot.lane.b32.xlu0 %v483, 20
    %v498 = vpop.permute.xlu0 %497
    %500 = vrot.lane.b32.xlu0 %v483, 24
    %v501 = vpop.permute.xlu0 %500
    %503 = vrot.lane.b32.xlu0 %v483, 28
    %v504 = vpop.permute.xlu0 %503
    %506 = vrot.lane.b32.xlu0 %v483, 32
    %v507 = vpop.permute.xlu0 %506
    %509 = vrot.lane.b32.xlu0 %v483, 36
    %v510 = vpop.permute.xlu0 %509
    %512 = vrot.lane.b32.xlu0 %v483, 40
    %v513 = vpop.permute.xlu0 %512
    %515 = vrot.lane.b32.xlu0 %v483, 44
    %v516 = vpop.permute.xlu0 %515
    %518 = vrot.lane.b32.xlu0 %v483, 48
    %v519 = vpop.permute.xlu0 %518
    %521 = vrot.lane.b32.xlu0 %v483, 52
    %v522 = vpop.permute.xlu0 %521
    %524 = vrot.lane.b32.xlu0 %v483, 56
    %v525 = vpop.permute.xlu0 %524
    %527 = vrot.lane.b32.xlu0 %v483, 60
    %v528 = vpop.permute.xlu0 %527
    %v530 = vsel %vm314, %v483, %v486
    %vm531 = vcmask 64512
    %v532 = vsel %vm531, %v530, %v489
    %vm533 = vcmask 97280
    %v534 = vsel %vm533, %v532, %v492
    %vm535 = vcmask 130048
    %v536 = vsel %vm535, %v534, %v495
    %vm537 = vcmask 162816
    %v538 = vsel %vm537, %v536, %v498
    %vm539 = vcmask 195584
    %v540 = vsel %vm539, %v538, %v501
    %vm541 = vcmask 228352
    %v542 = vsel %vm541, %v540, %v504
    %vm543 = vcmask 261120
    %v544 = vsel %vm543, %v542, %v507
    %vm545 = vcmask 293888
    %v546 = vsel %vm545, %v544, %v510
    %vm547 = vcmask 326656
    %v548 = vsel %vm547, %v546, %v513
    %vm549 = vcmask 359424
    %v550 = vsel %vm549, %v548, %v516
    %vm551 = vcmask 392192
    %v552 = vsel %vm551, %v550, %v519
    %vm553 = vcmask 424960
    %v554 = vsel %vm553, %v552, %v522
    %vm555 = vcmask 457728
    %v556 = vsel %vm555, %v554, %v525
    %vm557 = vcmask 490496
    %v558 = vsel %vm557, %v556, %v528
    %560 = vrot.lane.b32.xlu0 %v558, 64
    %v561 = vpop.permute.xlu0 %560
    %vm563 = vcmask 523264
    %v564 = vsel %vm563, %v558, %v561
    %v567 = vunpack.c.l.s4 1966171168
    %v568 = vunpack.c.0.s8 %v567
    %v569 = vlaneseq
    %v570 = vshrl.u32 %v569, 7
    %v571 = vsub.s32 %v568, %v570
    %v572 = vrot.slane %v564, %v571
    %v573 = vcombine.high %v572, %v572
    %v575 = vunpack.c.l.s4 1966171168
    %v576 = vunpack.c.0.s8 %v575
    %v577 = vlaneseq
    %v578 = vshrl.u32 %v577, 7
    %v579 = vsub.s32 %v576, %v578
    %v580 = vrot.slane %v572, %v579
    %v582 = vunpack.c.l.s4 1966171168
    %v583 = vunpack.c.0.s8 %v582
    %v584 = vlaneseq
    %v585 = vshrl.u32 %v584, 7
    %v586 = vsub.s32 %v583, %v585
    %v587 = vrot.slane %v573, %v586
    %v588 = vlaneseq
    %v589 = vshrl.u32 %v588, 7
    %v590 = vsub.s32 0, %v589
    %v591 = vrot.slane %v580, %v590
    %v592 = vlaneseq
    %v593 = vshrl.u32 %v592, 7
    %v594 = vsub.s32 0, %v593
    %v595 = vrot.slane %v587, %v594
    %v598 = vmul.f32 %v35, %v591
    %v599 = vmul.f32 %v36, %v595
    %600 = vst [vmem:[#allocation5] sm:$0xff] %v598
    %601 = vst [vmem:[#allocation5 + $0x8] sm:$0xff] %v599
    // Predicated region
    $region26: #{tpu_custom_call.1} parent=1 // pred_check
      _
    $region27: #{tpu_custom_call.1} parent=1 // pred_check_branch
      %603 = sbr.rel (0) target = $region29
    $region28: #{tpu_custom_call.1} parent=1 // pred_region
      %s605 = ssub.s32 256, 256
      %606 = vsyncadd [#allocation4], %s605
      %s607 = sshll.u32 [#allocation5], 4
      %s608 = int_to_ptr.vmem [resolvable:$true] %s607
      %613 = dma.vmem_to_hbm [thread:$0]  %s608, 256, %s5, [#allocation4], 128, 128, 8
    $region29: #{tpu_custom_call.1} parent=1 // pred_fallthru
      _
    // Predicated region
    $region30: #{tpu_custom_call.1} parent=1 // pred_check
      _
    $region31: #{tpu_custom_call.1} parent=1 // pred_check_branch
      %615 = sbr.rel (0) target = $region33
    $region32: #{tpu_custom_call.1} parent=1 // pred_region
      %616 = dma.done [#allocation4], 256
    $region33: #{tpu_custom_call.1} parent=1 // pred_fallthru
      _
    %617 = vsyncpa [#allocation3], 1
    %618 = vsyncpa [#allocation4], 1

// kernel: tpu_custom_call.1
$region0: #{tpu_custom_call.1}
  #allocation0 [shape = 'u32[]', space=smem, size = 0x4, offset = 0x4, fixed_abs, tag = 'smem constant byte address 0x4 - core index']
  #allocation1 [shape = 'u32[144,128]{1,0:T(1,128)}', space=vmem, size = 0x12000, scoped, tag = 'internal scratch']
  %s0 = inlined_call_operand.hbm [shape: f32[2,8,128], index: 0, kind: input, shape index: {}]
  %s1 = inlined_call_operand.vmem [shape: f32[4,2], index: 1, kind: input, shape index: {}]
  %s2 = inlined_call_operand.vmem [shape: f32[1,2], index: 2, kind: input, shape index: {}]
  %s3 = inlined_call_operand.vmem [shape: f32[2,4], index: 3, kind: input, shape index: {}]
  %s4 = inlined_call_operand.vmem [shape: f32[1,4], index: 4, kind: input, shape index: {}]
  %s5 = inlined_call_operand.hbm [shape: f32[2,8,128], index: 5, kind: output, shape index: {}]
  %s6 = sld [smem:[#allocation0]]
  $region34: #{tpu_custom_call.1} parent=0
    _
  %s8 = ssub.s32 1, %s6
  %s9 = scalar_select 0, %s8, %s6
  $region1: #{tpu_custom_call.1} parent=0
    #allocation2 [shape = 'u8[8192]{0}', space=vmem, size = 0x2000, scoped, tag = 'input window, operand 0, single buffered']
    #allocation3 [shape = 's32[1]{0}', space=sflag, size = 0x4, scoped, tag = 'scoped memory for tpu_custom_call.1']
    #allocation4 [shape = 's32[1]{0}', space=sflag, size = 0x4, scoped, tag = 'scoped memory for tpu_custom_call.1']
    #allocation5 [shape = 'u8[8192]{0}', space=vmem, size = 0x2000, scoped, tag = 'output window, operand 0, single buffered']
    %10 = vsyncpa [#allocation3], 0
    %11 = vsyncpa [#allocation4], 0
    // Predicated region
    $region2: #{tpu_custom_call.1} parent=1 // pred_check
      _
    $region3: #{tpu_custom_call.1} parent=1 // pred_check_branch
      %13 = sbr.rel (0) target = $region5
    $region4: #{tpu_custom_call.1} parent=1 // pred_region
      %s15 = ssub.s32 256, 256
      %16 = vsyncadd [#allocation3], %s15
      %s17 = sshll.u32 [#allocation2], 4
      %s18 = int_to_ptr.vmem [resolvable:$true] %s17
      %23 = dma.hbm_to_vmem [thread:$0]  %s0, 256, %s18, [#allocation3], 128, 128, 8
    $region5: #{tpu_custom_call.1} parent=1 // pred_fallthru
      _
    // Predicated region
    $region6: #{tpu_custom_call.1} parent=1 // pred_check
      _
    $region7: #{tpu_custom_call.1} parent=1 // pred_check_branch
      %25 = sbr.rel (0) target = $region9
    $region8: #{tpu_custom_call.1} parent=1 // pred_region
      _
    $region9: #{tpu_custom_call.1} parent=1 // pred_fallthru
      _
    // Predicated region
    $region10: #{tpu_custom_call.1} parent=1 // pred_check
      _
    $region11: #{tpu_custom_call.1} parent=1 // pred_check_branch
      %27 = sbr.rel (0) target = $region13
    $region12: #{tpu_custom_call.1} parent=1 // pred_region
      _
    $region13: #{tpu_custom_call.1} parent=1 // pred_fallthru
      _
    // Predicated region
    $region14: #{tpu_custom_call.1} parent=1 // pred_check
      _
    $region15: #{tpu_custom_call.1} parent=1 // pred_check_branch
      %29 = sbr.rel (0) target = $region17
    $region16: #{tpu_custom_call.1} parent=1 // pred_region
      _
    $region17: #{tpu_custom_call.1} parent=1 // pred_fallthru
      _
    // Predicated region
    $region18: #{tpu_custom_call.1} parent=1 // pred_check
      _
    $region19: #{tpu_custom_call.1} parent=1 // pred_check_branch
      %31 = sbr.rel (0) target = $region21
    $region20: #{tpu_custom_call.1} parent=1 // pred_region
      _
    $region21: #{tpu_custom_call.1} parent=1 // pred_fallthru
      _
    // Predicated region
    $region22: #{tpu_custom_call.1} parent=1 // pred_check
      _
    $region23: #{tpu_custom_call.1} parent=1 // pred_check_branch
      %33 = sbr.rel (0) target = $region25
    $region24: #{tpu_custom_call.1} parent=1 // pred_region
      %34 = dma.done [#allocation3], 256
    $region25: #{tpu_custom_call.1} parent=1 // pred_fallthru
      _
    %v35 = vld [vmem:[#allocation2] sm:$0xff]
    %v36 = vld [vmem:[#allocation2 + $0x8] sm:$0xff]
    %v37 = vrot.slane %v35, 4
    %v38 = vadd.f32 %v35, %v37
    %v39 = vrot.slane %v38, 2
    %v40 = vadd.f32 %v38, %v39
    %v41 = vrot.slane %v40, 1
    %v42 = vadd.f32 %v40, %v41
    %v43 = vrot.slane %v36, 4
    %v44 = vadd.f32 %v36, %v43
    %v45 = vrot.slane %v44, 2
    %v46 = vadd.f32 %v44, %v45
    %v47 = vrot.slane %v46, 1
    %v48 = vadd.f32 %v46, %v47
    %51 = vrot.lane.b32.xlu0 %v42, 124
    %v52 = vpop.permute.xlu0 %51
    %53 = vrot.lane.b32.xlu0 %v48, 124
    %v54 = vpop.permute.xlu0 %53
    %v57 = vadd.f32 %v42, %v52
    %v58 = vadd.f32 %v48, %v54
    %59 = vrot.lane.b32.xlu0 %v42, 120
    %v60 = vpop.permute.xlu0 %59
    %61 = vrot.lane.b32.xlu0 %v48, 120
    %v62 = vpop.permute.xlu0 %61
    %v65 = vadd.f32 %v57, %v60
    %v66 = vadd.f32 %v58, %v62
    %67 = vrot.lane.b32.xlu0 %v42, 116
    %v68 = vpop.permute.xlu0 %67
    %69 = vrot.lane.b32.xlu0 %v48, 116
    %v70 = vpop.permute.xlu0 %69
    %v73 = vadd.f32 %v65, %v68
    %v74 = vadd.f32 %v66, %v70
    %75 = vrot.lane.b32.xlu0 %v42, 112
    %v76 = vpop.permute.xlu0 %75
    %77 = vrot.lane.b32.xlu0 %v48, 112
    %v78 = vpop.permute.xlu0 %77
    %v81 = vadd.f32 %v73, %v76
    %v82 = vadd.f32 %v74, %v78
    %83 = vrot.lane.b32.xlu0 %v42, 108
    %v84 = vpop.permute.xlu0 %83
    %85 = vrot.lane.b32.xlu0 %v48, 108
    %v86 = vpop.permute.xlu0 %85
    %v89 = vadd.f32 %v81, %v84
    %v90 = vadd.f32 %v82, %v86
    %91 = vrot.lane.b32.xlu0 %v42, 104
    %v92 = vpop.permute.xlu0 %91
    %93 = vrot.lane.b32.xlu0 %v48, 104
    %v94 = vpop.permute.xlu0 %93
    %v97 = vadd.f32 %v89, %v92
    %v98 = vadd.f32 %v90, %v94
    %99 = vrot.lane.b32.xlu0 %v42, 100
    %v100 = vpop.permute.xlu0 %99
    %101 = vrot.lane.b32.xlu0 %v48, 100
    %v102 = vpop.permute.xlu0 %101
    %v105 = vadd.f32 %v97, %v100
    %v106 = vadd.f32 %v98, %v102
    %107 = vrot.lane.b32.xlu0 %v42, 96
    %v108 = vpop.permute.xlu0 %107
    %109 = vrot.lane.b32.xlu0 %v48, 96
    %v110 = vpop.permute.xlu0 %109
    %v113 = vadd.f32 %v105, %v108
    %v114 = vadd.f32 %v106, %v110
    %115 = vrot.lane.b32.xlu0 %v42, 92
    %v116 = vpop.permute.xlu0 %115
    %117 = vrot.lane.b32.xlu0 %v48, 92
    %v118 = vpop.permute.xlu0 %117
    %v121 = vadd.f32 %v113, %v116
    %v122 = vadd.f32 %v114, %v118
    %123 = vrot.lane.b32.xlu0 %v42, 88
    %v124 = vpop.permute.xlu0 %123
    %125 = vrot.lane.b32.xlu0 %v48, 88
    %v126 = vpop.permute.xlu0 %125
    %v129 = vadd.f32 %v121, %v124
    %v130 = vadd.f32 %v122, %v126
    %131 = vrot.lane.b32.xlu0 %v42, 84
    %v132 = vpop.permute.xlu0 %131
    %133 = vrot.lane.b32.xlu0 %v48, 84
    %v134 = vpop.permute.xlu0 %133
    %v137 = vadd.f32 %v129, %v132
    %v138 = vadd.f32 %v130, %v134
    %139 = vrot.lane.b32.xlu0 %v42, 80
    %v140 = vpop.permute.xlu0 %139
    %141 = vrot.lane.b32.xlu0 %v48, 80
    %v142 = vpop.permute.xlu0 %141
    %v145 = vadd.f32 %v137, %v140
    %v146 = vadd.f32 %v138, %v142
    %147 = vrot.lane.b32.xlu0 %v42, 76
    %v148 = vpop.permute.xlu0 %147
    %149 = vrot.lane.b32.xlu0 %v48, 76
    %v150 = vpop.permute.xlu0 %149
    %v153 = vadd.f32 %v145, %v148
    %v154 = vadd.f32 %v146, %v150
    %155 = vrot.lane.b32.xlu0 %v42, 72
    %v156 = vpop.permute.xlu0 %155
    %157 = vrot.lane.b32.xlu0 %v48, 72
    %v158 = vpop.permute.xlu0 %157
    %v161 = vadd.f32 %v153, %v156
    %v162 = vadd.f32 %v154, %v158
    %163 = vrot.lane.b32.xlu0 %v42, 68
    %v164 = vpop.permute.xlu0 %163
    %165 = vrot.lane.b32.xlu0 %v48, 68
    %v166 = vpop.permute.xlu0 %165
    %v169 = vadd.f32 %v161, %v164
    %v170 = vadd.f32 %v162, %v166
    %171 = vrot.lane.b32.xlu0 %v42, 64
    %v172 = vpop.permute.xlu0 %171
    %173 = vrot.lane.b32.xlu0 %v48, 64
    %v174 = vpop.permute.xlu0 %173
    %v177 = vadd.f32 %v169, %v172
    %v178 = vadd.f32 %v170, %v174
    %179 = vrot.lane.b32.xlu0 %v42, 60
    %v180 = vpop.permute.xlu0 %179
    %181 = vrot.lane.b32.xlu0 %v48, 60
    %v182 = vpop.permute.xlu0 %181
    %v185 = vadd.f32 %v177, %v180
    %v186 = vadd.f32 %v178, %v182
    %187 = vrot.lane.b32.xlu0 %v42, 56
    %v188 = vpop.permute.xlu0 %187
    %189 = vrot.lane.b32.xlu0 %v48, 56
    %v190 = vpop.permute.xlu0 %189
    %v193 = vadd.f32 %v185, %v188
    %v194 = vadd.f32 %v186, %v190
    %195 = vrot.lane.b32.xlu0 %v42, 52
    %v196 = vpop.permute.xlu0 %195
    %197 = vrot.lane.b32.xlu0 %v48, 52
    %v198 = vpop.permute.xlu0 %197
    %v201 = vadd.f32 %v193, %v196
    %v202 = vadd.f32 %v194, %v198
    %203 = vrot.lane.b32.xlu0 %v42, 48
    %v204 = vpop.permute.xlu0 %203
    %205 = vrot.lane.b32.xlu0 %v48, 48
    %v206 = vpop.permute.xlu0 %205
    %v209 = vadd.f32 %v201, %v204
    %v210 = vadd.f32 %v202, %v206
    %211 = vrot.lane.b32.xlu0 %v42, 44
    %v212 = vpop.permute.xlu0 %211
    %213 = vrot.lane.b32.xlu0 %v48, 44
    %v214 = vpop.permute.xlu0 %213
    %v217 = vadd.f32 %v209, %v212
    %v218 = vadd.f32 %v210, %v214
    %219 = vrot.lane.b32.xlu0 %v42, 40
    %v220 = vpop.permute.xlu0 %219
    %221 = vrot.lane.b32.xlu0 %v48, 40
    %v222 = vpop.permute.xlu0 %221
    %v225 = vadd.f32 %v217, %v220
    %v226 = vadd.f32 %v218, %v222
    %227 = vrot.lane.b32.xlu0 %v42, 36
    %v228 = vpop.permute.xlu0 %227
    %229 = vrot.lane.b32.xlu0 %v48, 36
    %v230 = vpop.permute.xlu0 %229
    %v233 = vadd.f32 %v225, %v228
    %v234 = vadd.f32 %v226, %v230
    %235 = vrot.lane.b32.xlu0 %v42, 32
    %v236 = vpop.permute.xlu0 %235
    %237 = vrot.lane.b32.xlu0 %v48, 32
    %v238 = vpop.permute.xlu0 %237
    %v241 = vadd.f32 %v233, %v236
    %v242 = vadd.f32 %v234, %v238
    %243 = vrot.lane.b32.xlu0 %v42, 28
    %v244 = vpop.permute.xlu0 %243
    %245 = vrot.lane.b32.xlu0 %v48, 28
    %v246 = vpop.permute.xlu0 %245
    %v249 = vadd.f32 %v241, %v244
    %v250 = vadd.f32 %v242, %v246
    %251 = vrot.lane.b32.xlu0 %v42, 24
    %v252 = vpop.permute.xlu0 %251
    %253 = vrot.lane.b32.xlu0 %v48, 24
    %v254 = vpop.permute.xlu0 %253
    %v257 = vadd.f32 %v249, %v252
    %v258 = vadd.f32 %v250, %v254
    %259 = vrot.lane.b32.xlu0 %v42, 20
    %v260 = vpop.permute.xlu0 %259
    %261 = vrot.lane.b32.xlu0 %v48, 20
    %v262 = vpop.permute.xlu0 %261
    %v265 = vadd.f32 %v257, %v260
    %v266 = vadd.f32 %v258, %v262
    %267 = vrot.lane.b32.xlu0 %v42, 16
    %v268 = vpop.permute.xlu0 %267
    %269 = vrot.lane.b32.xlu0 %v48, 16
    %v270 = vpop.permute.xlu0 %269
    %v273 = vadd.f32 %v265, %v268
    %v274 = vadd.f32 %v266, %v270
    %275 = vrot.lane.b32.xlu0 %v42, 12
    %v276 = vpop.permute.xlu0 %275
    %277 = vrot.lane.b32.xlu0 %v48, 12
    %v278 = vpop.permute.xlu0 %277
    %v281 = vadd.f32 %v273, %v276
    %v282 = vadd.f32 %v274, %v278
    %283 = vrot.lane.b32.xlu0 %v42, 8
    %v284 = vpop.permute.xlu0 %283
    %285 = vrot.lane.b32.xlu0 %v48, 8
    %v286 = vpop.permute.xlu0 %285
    %v289 = vadd.f32 %v281, %v284
    %v290 = vadd.f32 %v282, %v286
    %291 = vrot.lane.b32.xlu0 %v42, 4
    %v292 = vpop.permute.xlu0 %291
    %293 = vrot.lane.b32.xlu0 %v48, 4
    %v294 = vpop.permute.xlu0 %293
    %v297 = vadd.f32 %v289, %v292
    %v298 = vadd.f32 %v290, %v294
    %v299 = vmul.f32 %v297, 0.00390625
    %v300 = vmul.f32 %v298, 0.00390625
    %v301 = vld [vmem:[%s1] sm:$0xf]
    %v302 = vld [vmem:[%s2] sm:$0x1]
    %v304 = vlaneseq
    %v305 = vshrl.u32 %v304, 7
    %v306 = vsub.s32 0, %v305
    %v307 = vrot.slane %v302, %v306
    %v311 = vrot.slane %v300, 7
    %vm312 = vcmask 1041409
    %v313 = vsel %vm312, %v311, %v299
    %vm314 = vcmask 31744
    %v315 = vsel %vm314, %v313, 0
    %vm317 = vcmask 1043456
    %v319 = vsel %vm317, %v301, 0
    %321 = vmatprep.subr.mxu0 0.0
    %322 = vmatpush1.msra.mxu0 %v319
    %323 = vmatprep.subr.mxu0 0.0
    %324 = vmatpush1.msra.mxu0 0.0
    %325 = vmatprep.subr.mxu0 0.0
    %326 = vmatpush1.msra.mxu0 0.0
    %327 = vmatprep.subr.mxu0 0.0
    %328 = vmatpush1.msra.mxu0 0.0
    %329 = vmatprep.subr.mxu0 0.0
    %330 = vmatpush1.msra.mxu0 0.0
    %331 = vmatprep.subr.mxu0 0.0
    %332 = vmatpush1.msra.mxu0 0.0
    %333 = vmatprep.subr.mxu0 0.0
    %334 = vmatpush1.msra.mxu0 0.0
    %335 = vmatprep.subr.mxu0 0.0
    %336 = vmatpush1.msra.mxu0 0.0
    %337 = vmatprep.subr.mxu0 0.0
    %338 = vmatpush1.msra.mxu0 0.0
    %339 = vmatprep.subr.mxu0 0.0
    %340 = vmatpush1.msra.mxu0 0.0
    %341 = vmatprep.subr.mxu0 0.0
    %342 = vmatpush1.msra.mxu0 0.0
    %343 = vmatprep.subr.mxu0 0.0
    %344 = vmatpush1.msra.mxu0 0.0
    %345 = vmatprep.subr.mxu0 0.0
    %346 = vmatpush1.msra.mxu0 0.0
    %347 = vmatprep.subr.mxu0 0.0
    %348 = vmatpush1.msra.mxu0 0.0
    %349 = vmatprep.subr.mxu0 0.0
    %350 = vmatpush1.msra.mxu0 0.0
    %351 = vmatprep.subr.mxu0 0.0
    %352 = vmatpush1.msra.mxu0 0.0
    %353 = vmatprep.subr.mxu0 0.0
    %354 = vmatpush1.msra.mxu0 0.0
    %355 = vmatprep.subr.mxu0 0.0
    %356 = vmatpush1.msra.mxu0 0.0
    %357 = vmatprep.subr.mxu0 0.0
    %358 = vmatpush1.msra.mxu0 0.0
    %359 = vmatprep.subr.mxu0 0.0
    %360 = vmatpush1.msra.mxu0 0.0
    %361 = vmatprep.subr.mxu0 0.0
    %362 = vmatpush1.msra.mxu0 0.0
    %363 = vmatprep.subr.mxu0 0.0
    %364 = vmatpush1.msra.mxu0 0.0
    %365 = vmatprep.subr.mxu0 0.0
    %366 = vmatpush1.msra.mxu0 0.0
    %367 = vmatprep.subr.mxu0 0.0
    %368 = vmatpush1.msra.mxu0 0.0
    %369 = vmatprep.subr.mxu0 0.0
    %370 = vmatpush1.msra.mxu0 0.0
    %371 = vmatprep.subr.mxu0 0.0
    %372 = vmatpush1.msra.mxu0 0.0
    %373 = vmatprep.subr.mxu0 0.0
    %374 = vmatpush1.msra.mxu0 0.0
    %375 = vmatprep.subr.mxu0 0.0
    %376 = vmatpush1.msra.mxu0 0.0
    %377 = vmatprep.subr.mxu0 0.0
    %378 = vmatpush1.msra.mxu0 0.0
    %379 = vmatprep.subr.mxu0 0.0
    %380 = vmatpush1.msra.mxu0 0.0
    %381 = vmatprep.subr.mxu0 0.0
    %382 = vmatpush1.msra.mxu0 0.0
    %383 = vmatprep.subr.mxu0 0.0
    %384 = vmatpush1.msra.mxu0 0.0
    %385 = vmatprep.mubr.f32.mxu0 0.0
    %386 = vmatmul.mubr.f32.gmra.mrb[0].mxu0 %v315
    %v387 = vpop.f32.mrb[0].mxu0
    %v388 = vadd.f32 %v307, %v387
    %v389 = vpop.f32.mrb[0].mxu0
    %390 = vdwg.mxu0
    %v391 = vmax.f32 %v388, 0.0
    %v392 = vld [vmem:[%s3] sm:$0x3]
    %v393 = vld [vmem:[%s4] sm:$0x1]
    %v395 = vlaneseq
    %v396 = vshrl.u32 %v395, 7
    %v397 = vsub.s32 0, %v396
    %v398 = vrot.slane %v393, %v397
    %vm400 = vcmask 15360
    %v402 = vsel %vm400, %v391, 0
    %vm404 = vcmask 1041408
    %v406 = vsel %vm404, %v392, 0
    %408 = vmatprep.subr.mxu0 0.0
    %409 = vmatpush1.msra.mxu0 %v406
    %410 = vmatprep.subr.mxu0 0.0
    %411 = vmatpush1.msra.mxu0 0.0
    %412 = vmatprep.subr.mxu0 0.0
    %413 = vmatpush1.msra.mxu0 0.0
    %414 = vmatprep.subr.mxu0 0.0
    %415 = vmatpush1.msra.mxu0 0.0
    %416 = vmatprep.subr.mxu0 0.0
    %417 = vmatpush1.msra.mxu0 0.0
    %418 = vmatprep.subr.mxu0 0.0
    %419 = vmatpush1.msra.mxu0 0.0
    %420 = vmatprep.subr.mxu0 0.0
    %421 = vmatpush1.msra.mxu0 0.0
    %422 = vmatprep.subr.mxu0 0.0
    %423 = vmatpush1.msra.mxu0 0.0
    %424 = vmatprep.subr.mxu0 0.0
    %425 = vmatpush1.msra.mxu0 0.0
    %426 = vmatprep.subr.mxu0 0.0
    %427 = vmatpush1.msra.mxu0 0.0
    %428 = vmatprep.subr.mxu0 0.0
    %429 = vmatpush1.msra.mxu0 0.0
    %430 = vmatprep.subr.mxu0 0.0
    %431 = vmatpush1.msra.mxu0 0.0
    %432 = vmatprep.subr.mxu0 0.0
    %433 = vmatpush1.msra.mxu0 0.0
    %434 = vmatprep.subr.mxu0 0.0
    %435 = vmatpush1.msra.mxu0 0.0
    %436 = vmatprep.subr.mxu0 0.0
    %437 = vmatpush1.msra.mxu0 0.0
    %438 = vmatprep.subr.mxu0 0.0
    %439 = vmatpush1.msra.mxu0 0.0
    %440 = vmatprep.subr.mxu0 0.0
    %441 = vmatpush1.msra.mxu0 0.0
    %442 = vmatprep.subr.mxu0 0.0
    %443 = vmatpush1.msra.mxu0 0.0
    %444 = vmatprep.subr.mxu0 0.0
    %445 = vmatpush1.msra.mxu0 0.0
    %446 = vmatprep.subr.mxu0 0.0
    %447 = vmatpush1.msra.mxu0 0.0
    %448 = vmatprep.subr.mxu0 0.0
    %449 = vmatpush1.msra.mxu0 0.0
    %450 = vmatprep.subr.mxu0 0.0
    %451 = vmatpush1.msra.mxu0 0.0
    %452 = vmatprep.subr.mxu0 0.0
    %453 = vmatpush1.msra.mxu0 0.0
    %454 = vmatprep.subr.mxu0 0.0
    %455 = vmatpush1.msra.mxu0 0.0
    %456 = vmatprep.subr.mxu0 0.0
    %457 = vmatpush1.msra.mxu0 0.0
    %458 = vmatprep.subr.mxu0 0.0
    %459 = vmatpush1.msra.mxu0 0.0
    %460 = vmatprep.subr.mxu0 0.0
    %461 = vmatpush1.msra.mxu0 0.0
    %462 = vmatprep.subr.mxu0 0.0
    %463 = vmatpush1.msra.mxu0 0.0
    %464 = vmatprep.subr.mxu0 0.0
    %465 = vmatpush1.msra.mxu0 0.0
    %466 = vmatprep.subr.mxu0 0.0
    %467 = vmatpush1.msra.mxu0 0.0
    %468 = vmatprep.subr.mxu0 0.0
    %469 = vmatpush1.msra.mxu0 0.0
    %470 = vmatprep.subr.mxu0 0.0
    %471 = vmatpush1.msra.mxu0 0.0
    %472 = vmatprep.mubr.f32.mxu0 0.0
    %473 = vmatmul.mubr.f32.gmra.mrb[0].mxu0 %v402
    %v474 = vpop.f32.mrb[0].mxu0
    %v475 = vadd.f32 %v398, %v474
    %v476 = vpop.f32.mrb[0].mxu0
    %477 = vdwg.mxu0
    %v478 = vxor.u32 %v475, 2147483648
    %v479 = vmul.f32 %v478, 1.442695
    %v480 = vpow.pop %v479
    %v481 = vadd.f32 %v480, 1.0
    %v482 = vrcp.pop %v481
    %v483 = vmul.f32 1.0, %v482
    %485 = vrot.lane.b32.xlu0 %v483, 4
    %v486 = vpop.permute.xlu0 %485
    %488 = vrot.lane.b32.xlu0 %v483, 8
    %v489 = vpop.permute.xlu0 %488
    %491 = vrot.lane.b32.xlu0 %v483, 12
    %v492 = vpop.permute.xlu0 %491
    %494 = vrot.lane.b32.xlu0 %v483, 16
    %v495 = vpop.permute.xlu0 %494
    %497 = vrot.lane.b32.xlu0 %v483, 20
    %v498 = vpop.permute.xlu0 %497
    %500 = vrot.lane.b32.xlu0 %v483, 24
    %v501 = vpop.permute.xlu0 %500
    %503 = vrot.lane.b32.xlu0 %v483, 28
    %v504 = vpop.permute.xlu0 %503
    %506 = vrot.lane.b32.xlu0 %v483, 32
    %v507 = vpop.permute.xlu0 %506
    %509 = vrot.lane.b32.xlu0 %v483, 36
    %v510 = vpop.permute.xlu0 %509
    %512 = vrot.lane.b32.xlu0 %v483, 40
    %v513 = vpop.permute.xlu0 %512
    %515 = vrot.lane.b32.xlu0 %v483, 44
    %v516 = vpop.permute.xlu0 %515
    %518 = vrot.lane.b32.xlu0 %v483, 48
    %v519 = vpop.permute.xlu0 %518
    %521 = vrot.lane.b32.xlu0 %v483, 52
    %v522 = vpop.permute.xlu0 %521
    %524 = vrot.lane.b32.xlu0 %v483, 56
    %v525 = vpop.permute.xlu0 %524
    %527 = vrot.lane.b32.xlu0 %v483, 60
    %v528 = vpop.permute.xlu0 %527
    %v530 = vsel %vm314, %v483, %v486
    %vm531 = vcmask 64512
    %v532 = vsel %vm531, %v530, %v489
    %vm533 = vcmask 97280
    %v534 = vsel %vm533, %v532, %v492
    %vm535 = vcmask 130048
    %v536 = vsel %vm535, %v534, %v495
    %vm537 = vcmask 162816
    %v538 = vsel %vm537, %v536, %v498
    %vm539 = vcmask 195584
    %v540 = vsel %vm539, %v538, %v501
    %vm541 = vcmask 228352
    %v542 = vsel %vm541, %v540, %v504
    %vm543 = vcmask 261120
    %v544 = vsel %vm543, %v542, %v507
    %vm545 = vcmask 293888
    %v546 = vsel %vm545, %v544, %v510
    %vm547 = vcmask 326656
    %v548 = vsel %vm547, %v546, %v513
    %vm549 = vcmask 359424
    %v550 = vsel %vm549, %v548, %v516
    %vm551 = vcmask 392192
    %v552 = vsel %vm551, %v550, %v519
    %vm553 = vcmask 424960
    %v554 = vsel %vm553, %v552, %v522
    %vm555 = vcmask 457728
    %v556 = vsel %vm555, %v554, %v525
    %vm557 = vcmask 490496
    %v558 = vsel %vm557, %v556, %v528
    %560 = vrot.lane.b32.xlu0 %v558, 64
    %v561 = vpop.permute.xlu0 %560
    %vm563 = vcmask 523264
    %v564 = vsel %vm563, %v558, %v561
    %v567 = vunpack.c.l.s4 1966171168
    %v568 = vunpack.c.0.s8 %v567
    %v569 = vlaneseq
    %v570 = vshrl.u32 %v569, 7
    %v571 = vsub.s32 %v568, %v570
    %v572 = vrot.slane %v564, %v571
    %v573 = vcombine.high %v572, %v572
    %v575 = vunpack.c.l.s4 1966171168
    %v576 = vunpack.c.0.s8 %v575
    %v577 = vlaneseq
    %v578 = vshrl.u32 %v577, 7
    %v579 = vsub.s32 %v576, %v578
    %v580 = vrot.slane %v572, %v579
    %v582 = vunpack.c.l.s4 1966171168
    %v583 = vunpack.c.0.s8 %v582
    %v584 = vlaneseq
    %v585 = vshrl.u32 %v584, 7
    %v586 = vsub.s32 %v583, %v585
    %v587 = vrot.slane %v573, %v586
    %v588 = vlaneseq
    %v589 = vshrl.u32 %v588, 7
    %v590 = vsub.s32 0, %v589
    %v591 = vrot.slane %v580, %v590
    %v592 = vlaneseq
    %v593 = vshrl.u32 %v592, 7
    %v594 = vsub.s32 0, %v593
    %v595 = vrot.slane %v587, %v594
    %v598 = vmul.f32 %v35, %v591
    %v599 = vmul.f32 %v36, %v595
    %600 = vst [vmem:[#allocation5] sm:$0xff] %v598
    %601 = vst [vmem:[#allocation5 + $0x8] sm:$0xff] %v599
    // Predicated region
    $region26: #{tpu_custom_call.1} parent=1 // pred_check
      _
    $region27: #{tpu_custom_call.1} parent=1 // pred_check_branch
      %603 = sbr.rel (0) target = $region29
    $region28: #{tpu_custom_call.1} parent=1 // pred_region
      %s605 = ssub.s32 256, 256
      %606 = vsyncadd [#allocation4], %s605
      %s607 = sshll.u32 [#allocation5], 4
      %s608 = int_to_ptr.vmem [resolvable:$true] %s607
      %613 = dma.vmem_to_hbm [thread:$0]  %s608, 256, %s5, [#allocation4], 128, 128, 8
    $region29: #{tpu_custom_call.1} parent=1 // pred_fallthru
      _
    // Predicated region
    $region30: #{tpu_custom_call.1} parent=1 // pred_check
      _
    $region31: #{tpu_custom_call.1} parent=1 // pred_check_branch
      %615 = sbr.rel (0) target = $region33
    $region32: #{tpu_custom_call.1} parent=1 // pred_region
      %616 = dma.done [#allocation4], 256
    $region33: #{tpu_custom_call.1} parent=1 // pred_fallthru
      _
    %617 = vsyncpa [#allocation3], 1
    %618 = vsyncpa [#allocation4], 1

</llo_original>
